<compile_context>
chip_gen: v6e
topology: v6e:2x2x1
jax: 0.10.0
libtpu: 0.0.40
codegen_flags: <defaults>
</compile_context>

<pallas_src>
import functools

import jax
import jax.numpy as jnp
from jax.experimental import pallas as pl
from jax.experimental.pallas import tpu as pltpu


# ----------------------------------------------------------------------------
# helpers
# ----------------------------------------------------------------------------
def _round_up(x, m):
    return ((x + m - 1) // m) * m


def _pick_tile(m, cap):
    """Row-tile: multiple of 16 (bf16 sublane packing), capped, >= 16."""
    return max(16, min(cap, _round_up(m, 16)))


# ----------------------------------------------------------------------------
# Pallas kernels
# ----------------------------------------------------------------------------
def _matmul_bias_act_kernel(x_ref, w_ref, b_ref, o_ref, *, leaky_slope):
    """Fused GEMM (bf16 in, f32 acc) + bias (+ LeakyReLU) — the Conv3d hot path."""
    acc = jnp.dot(x_ref[...], w_ref[...], preferred_element_type=jnp.float32)
    acc = acc + b_ref[...]
    if leaky_slope is not None:
        acc = jnp.where(acc >= 0.0, acc, leaky_slope * acc)
    o_ref[...] = acc.astype(o_ref.dtype)


def _heads_sample_kl_kernel(x_ref, wm_ref, bm_ref, wv_ref, bv_ref, eps_ref,
                            z_ref, kl_ref, *,
                            max_var, epsilon, tile_m, total_m):
    """Fused mean/var 1x1x1 heads + reparameterisation + KL partial sums.

    x_ref  : (tile_m, C) bf16 — encoder trunk output
    wm/wv  : (C, C) bf16, bm/bv : (1, C) f32
    eps_ref: (tile_m, C) f32
    z_ref  : (tile_m, C) f32   z = mean + eps * exp(0.5 * min(var, max_var))
    kl_ref : (1, 8, 128) f32   per-tile partial sum of std^2+mean^2-log(std+eps)-0.5
                               stored at [0, 0, 0] (rows past total_m masked out).
    """
    x = x_ref[...]
    mean = jnp.dot(x, wm_ref[...], preferred_element_type=jnp.float32) + bm_ref[...]
    var = jnp.dot(x, wv_ref[...], preferred_element_type=jnp.float32) + bv_ref[...]
    std = jnp.exp(0.5 * jnp.minimum(var, max_var))
    z_ref[...] = (mean + eps_ref[...] * std).astype(z_ref.dtype)

    contrib = std * std + mean * mean - jnp.log(std + epsilon) - 0.5
    row = (jax.lax.broadcasted_iota(jnp.int32, contrib.shape, 0)
           + pl.program_id(0) * tile_m)
    contrib = jnp.where(row < total_m, contrib, 0.0)
    partial = jnp.sum(contrib)

    sub = jax.lax.broadcasted_iota(jnp.int32, kl_ref.shape, 1)
    lane = jax.lax.broadcasted_iota(jnp.int32, kl_ref.shape, 2)
    kl_ref[...] = jnp.where((sub == 0) & (lane == 0), partial, 0.0).astype(
        jnp.float32)


# ----------------------------------------------------------------------------
# Pallas wrappers
# ----------------------------------------------------------------------------
def matmul_bias_act(x, w, b, leaky_slope=None, out_dtype=jnp.float32,
                    tile_m_cap=512):
    """x: (M, K), w: (K, C), b: (C,) -> (M, C), optional LeakyReLU.

    Tiled over M; weight/bias VMEM-resident; bf16 inputs, f32 accumulation.
    Partial last M-tile is handled by Pallas (OOB rows masked on store).
    """
    M, K = x.shape
    K2, C = w.shape
    assert K == K2
    x = x.astype(jnp.bfloat16)
    w = w.astype(jnp.bfloat16)
    b = b.reshape(1, C).astype(jnp.float32)

    # Keep the double-buffered bf16 x-tile under ~8 MiB so large-K layers fit
    # comfortably in scoped VMEM alongside the resident weight.
    cap = max(16, min(tile_m_cap, ((4 << 20) // max(1, K * 2)) // 16 * 16))
    tm = _pick_tile(M, cap)
    grid = (pl.cdiv(M, tm),)

    return pl.pallas_call(
        functools.partial(_matmul_bias_act_kernel, leaky_slope=leaky_slope),
        out_shape=jax.ShapeDtypeStruct((M, C), out_dtype),
        grid=grid,
        in_specs=[
            pl.BlockSpec((tm, K), lambda i: (i, 0)),
            pl.BlockSpec((K, C), lambda i: (0, 0)),   # resident weight
            pl.BlockSpec((1, C), lambda i: (0, 0)),   # resident bias
        ],
        out_specs=pl.BlockSpec((tm, C), lambda i: (i, 0)),
        compiler_params=pltpu.CompilerParams(
            dimension_semantics=("parallel",),
            vmem_limit_bytes=32 * 1024 * 1024,
        ),
    )(x, w, b)


def heads_sample_kl(x2, wm, bm, wv, bv, eps, max_var, epsilon, tile_m_cap=512):
    """x2: (M, C) trunk output -> (z (M, C) f32, kl scalar).

    One fused pass: mean/var GEMMs + reparameterisation + KL partials.
    """
    M, C = x2.shape
    x2 = x2.astype(jnp.bfloat16)
    wm = wm.astype(jnp.bfloat16)
    wv = wv.astype(jnp.bfloat16)
    bm = bm.reshape(1, C).astype(jnp.float32)
    bv = bv.reshape(1, C).astype(jnp.float32)
    eps = eps.astype(jnp.float32)

    tm = _pick_tile(M, tile_m_cap)
    g = pl.cdiv(M, tm)

    kernel = functools.partial(
        _heads_sample_kl_kernel, max_var=float(max_var),
        epsilon=float(epsilon), tile_m=tm, total_m=M)

    z, kl_parts = pl.pallas_call(
        kernel,
        out_shape=(jax.ShapeDtypeStruct((M, C), jnp.float32),
                   jax.ShapeDtypeStruct((g, 8, 128), jnp.float32)),
        grid=(g,),
        in_specs=[
            pl.BlockSpec((tm, C), lambda i: (i, 0)),
            pl.BlockSpec((C, C), lambda i: (0, 0)),   # resident mean weight
            pl.BlockSpec((1, C), lambda i: (0, 0)),   # resident mean bias
            pl.BlockSpec((C, C), lambda i: (0, 0)),   # resident var weight
            pl.BlockSpec((1, C), lambda i: (0, 0)),   # resident var bias
            pl.BlockSpec((tm, C), lambda i: (i, 0)),
        ],
        out_specs=(
            pl.BlockSpec((tm, C), lambda i: (i, 0)),
            pl.BlockSpec((1, 8, 128), lambda i: (i, 0, 0)),
        ),
        compiler_params=pltpu.CompilerParams(
            dimension_semantics=("parallel",),
            vmem_limit_bytes=32 * 1024 * 1024,
        ),
    )(x2, wm, bm, wv, bv, eps)

    kl = jnp.sum(kl_parts) / (M * C)
    return z, kl


# ----------------------------------------------------------------------------
# Conv3d = im2col (JAX glue, bf16) + tiled Pallas GEMM
# ----------------------------------------------------------------------------
def conv3d_ndhwc(x, w, b, stride, padding, leaky_slope, out_dtype=jnp.bfloat16):
    """x: (N, D, H, W, Cin); w: (Kd, Kh, Kw, Cin, Cout); b: (Cout,)."""
    N, D, H, W, Cin = x.shape
    Kd, Kh, Kw, _, Cout = w.shape

    x = x.astype(jnp.bfloat16)          # halve im2col HBM traffic
    xp = jnp.pad(
        x, ((0, 0), (padding, padding), (padding, padding),
            (padding, padding), (0, 0)))

    Do = (D + 2 * padding - Kd) // stride + 1
    Ho = (H + 2 * padding - Kh) // stride + 1
    Wo = (W + 2 * padding - Kw) // stride + 1

    patches = []
    for kd in range(Kd):
        for kh in range(Kh):
            for kw in range(Kw):
                patches.append(
                    xp[:,
                       kd:kd + (Do - 1) * stride + 1:stride,
                       kh:kh + (Ho - 1) * stride + 1:stride,
                       kw:kw + (Wo - 1) * stride + 1:stride,
                       :])
    pat = jnp.concatenate(patches, axis=-1)            # (N, Do, Ho, Wo, K)

    M = N * Do * Ho * Wo
    K = Kd * Kh * Kw * Cin
    out = matmul_bias_act(pat.reshape(M, K), w.reshape(K, Cout), b,
                          leaky_slope, out_dtype=out_dtype)
    return out.reshape(N, Do, Ho, Wo, Cout)


# ----------------------------------------------------------------------------
# Encoder parameters + forward
# ----------------------------------------------------------------------------
def init_encoder_params(key, num_chs):
    n_layers = len(num_chs) - 1
    keys = jax.random.split(key, 4 * n_layers + 4)
    ki = 0

    def wb(kw, kb, ks, cin, cout):
        w = 0.1 * jax.random.normal(kw, (ks, ks, ks, cin, cout), jnp.float32)
        b = 0.01 * jax.random.normal(kb, (cout,), jnp.float32)
        return w, b

    params = {"layers": []}
    ks, st = 3, 2
    for l, (ch_in, ch_out) in enumerate(zip(num_chs[:-1], num_chs[1:])):
        ch_in_exp = ch_in + 1 if l == 0 else ch_in * 2
        if l == 5:                      # mirrors the PyTorch module's behaviour
            ks, st = 1, 1
        pad = (ks - 1) // 2
        w1, b1 = wb(keys[ki], keys[ki + 1], ks, ch_in_exp, ch_out); ki += 2
        w2, b2 = wb(keys[ki], keys[ki + 1], ks, ch_out, ch_out);   ki += 2
        # each entry: (weight, bias, stride, padding, leaky_slope)
        params["layers"].append([(w1, b1, st, pad, 0.1), (w2, b2, 1, pad, 0.1)])

    C = num_chs[-1]
    params["mean_w"] = 0.1 * jax.random.normal(keys[ki], (C, C), jnp.float32); ki += 1
    params["mean_b"] = 0.01 * jax.random.normal(keys[ki], (C,), jnp.float32);  ki += 1
    params["var_w"] = 0.1 * jax.random.normal(keys[ki], (C, C), jnp.float32);  ki += 1
    params["var_b"] = 0.01 * jax.random.normal(keys[ki], (C,), jnp.float32);   ki += 1
    return params


def encoder_forward(params, flow_ncdhw, condition_pyramid_ncdhw, eps_key,
                    max_var=6.0, epsilon=1e-8):
    # NCDHW -> NDHWC
    x = jnp.transpose(flow_ncdhw, (0, 2, 3, 4, 1))
    conds = [jnp.transpose(c, (0, 2, 3, 4, 1)) for c in condition_pyramid_ncdhw][::-1]

    for layer, cond in zip(params["layers"], conds):
        x = jnp.concatenate([x.astype(jnp.bfloat16),
                             cond.astype(jnp.bfloat16)], axis=-1)  # channel concat
        for (w, b, stride, pad, leaky) in layer:
            x = conv3d_ndhwc(x, w, b, stride, pad, leaky, out_dtype=jnp.bfloat16)

    N, D, H, W, C = x.shape
    M = N * D * H * W
    x2 = x.reshape(M, C)

    # eps ~ N(0, 1) (deterministic stand-in for torch.randn_like)
    eps2 = jax.random.normal(eps_key, (M, C), dtype=jnp.float32)

    # Fused mean/var heads + reparameterisation + KL (PyTorch stores KL on
    # self.kl; we return it).
    z2, kl = heads_sample_kl(x2, params["mean_w"], params["mean_b"],
                             params["var_w"], params["var_b"],
                             eps2, max_var, epsilon)

    z = jnp.transpose(z2.reshape(N, D, H, W, C), (0, 4, 1, 2, 3))  # back to NCDHW
    return z, kl


# ----------------------------------------------------------------------------
if __name__ == "__main__":
    num_chs = [4, 8, 16]                 # 2 encoder layers
    N, D, H, W = 2, 8, 8, 8

    key = jax.random.PRNGKey(0)
    kp, kf, kc_fine, kc_coarse, ke = jax.random.split(key, 5)

    params = init_encoder_params(kp, num_chs)

    flow = jax.random.normal(kf, (N, 1, D, H, W), jnp.float32)
    # condition_pyramid is coarse->fine; forward() consumes it reversed.
    cond_fine = jax.random.normal(kc_fine, (N, num_chs[0], D, H, W), jnp.float32)
    cond_coarse = jax.random.normal(
        kc_coarse, (N, num_chs[1], D // 2, H // 2, W // 2), jnp.float32
    )
    condition_pyramid = [cond_coarse, cond_fine]

    # jit the whole forward (params closed over -> strides/pads stay static);
    # this lets XLA fuse the im2col / transpose glue around the Pallas calls.
    fwd = jax.jit(functools.partial(encoder_forward, params))

    z, kl = fwd(flow, condition_pyramid, ke)
    jax.block_until_ready(z)
    jax.block_until_ready(kl)

    expected_shape = (N, num_chs[-1], D // 4, H // 4, W // 4)
    assert z.shape == expected_shape, (z.shape, expected_shape)
    assert bool(jnp.isfinite(kl)), "KL is not finite"
    print("KERNEL_OK")
</pallas_src>

<mosaic_0001>
module attributes {stable_mosaic.version = 11 : i64} {
  func.func @_matmul_bias_act_kernel(%arg0: i32, %arg1: memref<128x135xbf16, #tpu.memory_space<vmem>>, %arg2: memref<135x8xbf16, #tpu.memory_space<vmem>>, %arg3: memref<1x8xf32, #tpu.memory_space<vmem>>, %arg4: memref<128x8xbf16, #tpu.memory_space<vmem>>) attributes {dimension_semantics = [#tpu.dimension_semantics<parallel>], iteration_bounds = array<i64: 1>, scalar_prefetch = 0 : i64, scratch_operands = 0 : i64, tpu.core_type = #tpu.core_type<tc>, window_params = [{transform_indices = @transform_0, window_bounds = array<i64: 128, 135>}, {pipeline_mode = #tpu.pipeline_mode<synchronous>, transform_indices = @transform_1, window_bounds = array<i64: 135, 8>}, {pipeline_mode = #tpu.pipeline_mode<synchronous>, transform_indices = @transform_2, window_bounds = array<i64: 1, 8>}, {transform_indices = @transform_3, window_bounds = array<i64: 128, 8>}]} {
    %c0 = arith.constant 0 : index
    %c0_0 = arith.constant 0 : index
    %0 = vector.load %arg1[%c0, %c0_0] : memref<128x135xbf16, #tpu.memory_space<vmem>>, vector<128x135xbf16>
    %c0_1 = arith.constant 0 : index
    %c0_2 = arith.constant 0 : index
    %1 = vector.load %arg2[%c0_1, %c0_2] : memref<135x8xbf16, #tpu.memory_space<vmem>>, vector<135x8xbf16>
    %cst = arith.constant dense<0.000000e+00> : vector<128x8xf32>
    %2 = tpu.matmul %0, %1, %cst {dimension_numbers = #tpu.dot_dimension_numbers<[1], [0], [0], [1], [0, 0, 1, 1], [], []>} : vector<128x135xbf16>, vector<135x8xbf16>, vector<128x8xf32> -> vector<128x8xf32>
    %c0_3 = arith.constant 0 : index
    %c0_4 = arith.constant 0 : index
    %3 = vector.load %arg3[%c0_3, %c0_4] : memref<1x8xf32, #tpu.memory_space<vmem>>, vector<1x8xf32>
    %4 = vector.broadcast %3 : vector<1x8xf32> to vector<128x8xf32>
    %5 = arith.addf %2, %4 : vector<128x8xf32>
    %cst_5 = arith.constant 0.000000e+00 : f32
    %6 = vector.broadcast %cst_5 : f32 to vector<128x8xf32>
    %7 = arith.cmpf oge, %5, %6 : vector<128x8xf32>
    %cst_6 = arith.constant 1.000000e-01 : f32
    %8 = vector.broadcast %cst_6 : f32 to vector<128x8xf32>
    %9 = arith.mulf %8, %5 : vector<128x8xf32>
    %10 = arith.select %7, %5, %9 : vector<128x8xi1>, vector<128x8xf32>
    %11 = arith.truncf %10 : vector<128x8xf32> to vector<128x8xbf16>
    %c0_7 = arith.constant 0 : index
    %c0_8 = arith.constant 0 : index
    %12 = vector.load %arg4[%c0_7, %c0_8] : memref<128x8xbf16, #tpu.memory_space<vmem>>, vector<128x8xbf16>
    tpu.vector_store %arg4[%c0_7, %c0_8], %11 {strides = array<i32>} : memref<128x8xbf16, #tpu.memory_space<vmem>>, vector<128x8xbf16>,
    return
  }
  func.func @transform_0(%arg0: i32) -> (i32, i32) {
    %c0_i32 = arith.constant 0 : i32
    %c0_i32_0 = arith.constant 0 : i32
    return %arg0, %c0_i32 : i32, i32
  }
  func.func @transform_1(%arg0: i32) -> (i32, i32) {
    %c0_i32 = arith.constant 0 : i32
    %c0_i32_0 = arith.constant 0 : i32
    %c0_i32_1 = arith.constant 0 : i32
    return %c0_i32, %c0_i32_0 : i32, i32
  }
  func.func @transform_2(%arg0: i32) -> (i32, i32) {
    %c0_i32 = arith.constant 0 : i32
    %c0_i32_0 = arith.constant 0 : i32
    %c0_i32_1 = arith.constant 0 : i32
    return %c0_i32, %c0_i32_0 : i32, i32
  }
  func.func @transform_3(%arg0: i32) -> (i32, i32) {
    %c0_i32 = arith.constant 0 : i32
    %c0_i32_0 = arith.constant 0 : i32
    return %arg0, %c0_i32 : i32, i32
  }
}

module attributes {stable_mosaic.version = 11 : i64} {
  func.func @_matmul_bias_act_kernel(%arg0: i32, %arg1: memref<128x216xbf16, #tpu.memory_space<vmem>>, %arg2: memref<216x8xbf16, #tpu.memory_space<vmem>>, %arg3: memref<1x8xf32, #tpu.memory_space<vmem>>, %arg4: memref<128x8xbf16, #tpu.memory_space<vmem>>) attributes {dimension_semantics = [#tpu.dimension_semantics<parallel>], iteration_bounds = array<i64: 1>, scalar_prefetch = 0 : i64, scratch_operands = 0 : i64, tpu.core_type = #tpu.core_type<tc>, window_params = [{transform_indices = @transform_0, window_bounds = array<i64: 128, 216>}, {pipeline_mode = #tpu.pipeline_mode<synchronous>, transform_indices = @transform_1, window_bounds = array<i64: 216, 8>}, {pipeline_mode = #tpu.pipeline_mode<synchronous>, transform_indices = @transform_2, window_bounds = array<i64: 1, 8>}, {transform_indices = @transform_3, window_bounds = array<i64: 128, 8>}]} {
    %c0 = arith.constant 0 : index
    %c0_0 = arith.constant 0 : index
    %0 = vector.load %arg1[%c0, %c0_0] : memref<128x216xbf16, #tpu.memory_space<vmem>>, vector<128x216xbf16>
    %c0_1 = arith.constant 0 : index
    %c0_2 = arith.constant 0 : index
    %1 = vector.load %arg2[%c0_1, %c0_2] : memref<216x8xbf16, #tpu.memory_space<vmem>>, vector<216x8xbf16>
    %cst = arith.constant dense<0.000000e+00> : vector<128x8xf32>
    %2 = tpu.matmul %0, %1, %cst {dimension_numbers = #tpu.dot_dimension_numbers<[1], [0], [0], [1], [0, 0, 1, 1], [], []>} : vector<128x216xbf16>, vector<216x8xbf16>, vector<128x8xf32> -> vector<128x8xf32>
    %c0_3 = arith.constant 0 : index
    %c0_4 = arith.constant 0 : index
    %3 = vector.load %arg3[%c0_3, %c0_4] : memref<1x8xf32, #tpu.memory_space<vmem>>, vector<1x8xf32>
    %4 = vector.broadcast %3 : vector<1x8xf32> to vector<128x8xf32>
    %5 = arith.addf %2, %4 : vector<128x8xf32>
    %cst_5 = arith.constant 0.000000e+00 : f32
    %6 = vector.broadcast %cst_5 : f32 to vector<128x8xf32>
    %7 = arith.cmpf oge, %5, %6 : vector<128x8xf32>
    %cst_6 = arith.constant 1.000000e-01 : f32
    %8 = vector.broadcast %cst_6 : f32 to vector<128x8xf32>
    %9 = arith.mulf %8, %5 : vector<128x8xf32>
    %10 = arith.select %7, %5, %9 : vector<128x8xi1>, vector<128x8xf32>
    %11 = arith.truncf %10 : vector<128x8xf32> to vector<128x8xbf16>
    %c0_7 = arith.constant 0 : index
    %c0_8 = arith.constant 0 : index
    %12 = vector.load %arg4[%c0_7, %c0_8] : memref<128x8xbf16, #tpu.memory_space<vmem>>, vector<128x8xbf16>
    tpu.vector_store %arg4[%c0_7, %c0_8], %11 {strides = array<i32>} : memref<128x8xbf16, #tpu.memory_space<vmem>>, vector<128x8xbf16>,
    return
  }
  func.func @transform_0(%arg0: i32) -> (i32, i32) {
    %c0_i32 = arith.constant 0 : i32
    %c0_i32_0 = arith.constant 0 : i32
    return %arg0, %c0_i32 : i32, i32
  }
  func.func @transform_1(%arg0: i32) -> (i32, i32) {
    %c0_i32 = arith.constant 0 : i32
    %c0_i32_0 = arith.constant 0 : i32
    %c0_i32_1 = arith.constant 0 : i32
    return %c0_i32, %c0_i32_0 : i32, i32
  }
  func.func @transform_2(%arg0: i32) -> (i32, i32) {
    %c0_i32 = arith.constant 0 : i32
    %c0_i32_0 = arith.constant 0 : i32
    %c0_i32_1 = arith.constant 0 : i32
    return %c0_i32, %c0_i32_0 : i32, i32
  }
  func.func @transform_3(%arg0: i32) -> (i32, i32) {
    %c0_i32 = arith.constant 0 : i32
    %c0_i32_0 = arith.constant 0 : i32
    return %arg0, %c0_i32 : i32, i32
  }
}

module attributes {stable_mosaic.version = 11 : i64} {
  func.func @_matmul_bias_act_kernel(%arg0: i32, %arg1: memref<16x432xbf16, #tpu.memory_space<vmem>>, %arg2: memref<432x16xbf16, #tpu.memory_space<vmem>>, %arg3: memref<1x16xf32, #tpu.memory_space<vmem>>, %arg4: memref<16x16xbf16, #tpu.memory_space<vmem>>) attributes {dimension_semantics = [#tpu.dimension_semantics<parallel>], iteration_bounds = array<i64: 1>, scalar_prefetch = 0 : i64, scratch_operands = 0 : i64, tpu.core_type = #tpu.core_type<tc>, window_params = [{transform_indices = @transform_0, window_bounds = array<i64: 16, 432>}, {pipeline_mode = #tpu.pipeline_mode<synchronous>, transform_indices = @transform_1, window_bounds = array<i64: 432, 16>}, {pipeline_mode = #tpu.pipeline_mode<synchronous>, transform_indices = @transform_2, window_bounds = array<i64: 1, 16>}, {transform_indices = @transform_3, window_bounds = array<i64: 16, 16>}]} {
    %c0 = arith.constant 0 : index
    %c0_0 = arith.constant 0 : index
    %0 = vector.load %arg1[%c0, %c0_0] : memref<16x432xbf16, #tpu.memory_space<vmem>>, vector<16x432xbf16>
    %c0_1 = arith.constant 0 : index
    %c0_2 = arith.constant 0 : index
    %1 = vector.load %arg2[%c0_1, %c0_2] : memref<432x16xbf16, #tpu.memory_space<vmem>>, vector<432x16xbf16>
    %cst = arith.constant dense<0.000000e+00> : vector<16x16xf32>
    %2 = tpu.matmul %0, %1, %cst {dimension_numbers = #tpu.dot_dimension_numbers<[1], [0], [0], [1], [0, 0, 1, 1], [], []>} : vector<16x432xbf16>, vector<432x16xbf16>, vector<16x16xf32> -> vector<16x16xf32>
    %c0_3 = arith.constant 0 : index
    %c0_4 = arith.constant 0 : index
    %3 = vector.load %arg3[%c0_3, %c0_4] : memref<1x16xf32, #tpu.memory_space<vmem>>, vector<1x16xf32>
    %4 = vector.broadcast %3 : vector<1x16xf32> to vector<16x16xf32>
    %5 = arith.addf %2, %4 : vector<16x16xf32>
    %cst_5 = arith.constant 0.000000e+00 : f32
    %6 = vector.broadcast %cst_5 : f32 to vector<16x16xf32>
    %7 = arith.cmpf oge, %5, %6 : vector<16x16xf32>
    %cst_6 = arith.constant 1.000000e-01 : f32
    %8 = vector.broadcast %cst_6 : f32 to vector<16x16xf32>
    %9 = arith.mulf %8, %5 : vector<16x16xf32>
    %10 = arith.select %7, %5, %9 : vector<16x16xi1>, vector<16x16xf32>
    %11 = arith.truncf %10 : vector<16x16xf32> to vector<16x16xbf16>
    %c0_7 = arith.constant 0 : index
    %c0_8 = arith.constant 0 : index
    %12 = vector.load %arg4[%c0_7, %c0_8] : memref<16x16xbf16, #tpu.memory_space<vmem>>, vector<16x16xbf16>
    tpu.vector_store %arg4[%c0_7, %c0_8], %11 {strides = array<i32>} : memref<16x16xbf16, #tpu.memory_space<vmem>>, vector<16x16xbf16>,
    return
  }
  func.func @transform_0(%arg0: i32) -> (i32, i32) {
    %c0_i32 = arith.constant 0 : i32
    %c0_i32_0 = arith.constant 0 : i32
    return %arg0, %c0_i32 : i32, i32
  }
  func.func @transform_1(%arg0: i32) -> (i32, i32) {
    %c0_i32 = arith.constant 0 : i32
    %c0_i32_0 = arith.constant 0 : i32
    %c0_i32_1 = arith.constant 0 : i32
    return %c0_i32, %c0_i32_0 : i32, i32
  }
  func.func @transform_2(%arg0: i32) -> (i32, i32) {
    %c0_i32 = arith.constant 0 : i32
    %c0_i32_0 = arith.constant 0 : i32
    %c0_i32_1 = arith.constant 0 : i32
    return %c0_i32, %c0_i32_0 : i32, i32
  }
  func.func @transform_3(%arg0: i32) -> (i32, i32) {
    %c0_i32 = arith.constant 0 : i32
    %c0_i32_0 = arith.constant 0 : i32
    return %arg0, %c0_i32 : i32, i32
  }
}

module attributes {stable_mosaic.version = 11 : i64} {
  func.func @_heads_sample_kl_kernel(%arg0: i32, %arg1: memref<16x16xbf16, #tpu.memory_space<vmem>>, %arg2: memref<16x16xbf16, #tpu.memory_space<vmem>>, %arg3: memref<1x16xf32, #tpu.memory_space<vmem>>, %arg4: memref<16x16xbf16, #tpu.memory_space<vmem>>, %arg5: memref<1x16xf32, #tpu.memory_space<vmem>>, %arg6: memref<16x16xf32, #tpu.memory_space<vmem>>, %arg7: memref<16x16xf32, #tpu.memory_space<vmem>>, %arg8: memref<1x8x128xf32, #tpu.memory_space<vmem>>) attributes {dimension_semantics = [#tpu.dimension_semantics<parallel>], iteration_bounds = array<i64: 1>, scalar_prefetch = 0 : i64, scratch_operands = 0 : i64, tpu.core_type = #tpu.core_type<tc>, window_params = [{transform_indices = @transform_0, window_bounds = array<i64: 16, 16>}, {pipeline_mode = #tpu.pipeline_mode<synchronous>, transform_indices = @transform_1, window_bounds = array<i64: 16, 16>}, {pipeline_mode = #tpu.pipeline_mode<synchronous>, transform_indices = @transform_2, window_bounds = array<i64: 1, 16>}, {pipeline_mode = #tpu.pipeline_mode<synchronous>, transform_indices = @transform_3, window_bounds = array<i64: 16, 16>}, {pipeline_mode = #tpu.pipeline_mode<synchronous>, transform_indices = @transform_4, window_bounds = array<i64: 1, 16>}, {transform_indices = @transform_5, window_bounds = array<i64: 16, 16>}, {transform_indices = @transform_6, window_bounds = array<i64: 16, 16>}, {transform_indices = @transform_7, window_bounds = array<i64: 1, 8, 128>}]} {
    %c0 = arith.constant 0 : index
    %c0_0 = arith.constant 0 : index
    %0 = vector.load %arg1[%c0, %c0_0] : memref<16x16xbf16, #tpu.memory_space<vmem>>, vector<16x16xbf16>
    %c0_1 = arith.constant 0 : index
    %c0_2 = arith.constant 0 : index
    %1 = vector.load %arg2[%c0_1, %c0_2] : memref<16x16xbf16, #tpu.memory_space<vmem>>, vector<16x16xbf16>
    %cst = arith.constant dense<0.000000e+00> : vector<16x16xf32>
    %2 = tpu.matmul %0, %1, %cst {dimension_numbers = #tpu.dot_dimension_numbers<[1], [0], [0], [1], [0, 0, 1, 1], [], []>} : vector<16x16xbf16>, vector<16x16xbf16>, vector<16x16xf32> -> vector<16x16xf32>
    %c0_3 = arith.constant 0 : index
    %c0_4 = arith.constant 0 : index
    %3 = vector.load %arg3[%c0_3, %c0_4] : memref<1x16xf32, #tpu.memory_space<vmem>>, vector<1x16xf32>
    %4 = vector.broadcast %3 : vector<1x16xf32> to vector<16x16xf32>
    %5 = arith.addf %2, %4 : vector<16x16xf32>
    %c0_5 = arith.constant 0 : index
    %c0_6 = arith.constant 0 : index
    %6 = vector.load %arg4[%c0_5, %c0_6] : memref<16x16xbf16, #tpu.memory_space<vmem>>, vector<16x16xbf16>
    %cst_7 = arith.constant dense<0.000000e+00> : vector<16x16xf32>
    %7 = tpu.matmul %0, %6, %cst_7 {dimension_numbers = #tpu.dot_dimension_numbers<[1], [0], [0], [1], [0, 0, 1, 1], [], []>} : vector<16x16xbf16>, vector<16x16xbf16>, vector<16x16xf32> -> vector<16x16xf32>
    %c0_8 = arith.constant 0 : index
    %c0_9 = arith.constant 0 : index
    %8 = vector.load %arg5[%c0_8, %c0_9] : memref<1x16xf32, #tpu.memory_space<vmem>>, vector<1x16xf32>
    %9 = vector.broadcast %8 : vector<1x16xf32> to vector<16x16xf32>
    %10 = arith.addf %7, %9 : vector<16x16xf32>
    %cst_10 = arith.constant 6.000000e+00 : f32
    %11 = vector.broadcast %cst_10 : f32 to vector<16x16xf32>
    %12 = arith.minimumf %10, %11 : vector<16x16xf32>
    %cst_11 = arith.constant 5.000000e-01 : f32
    %13 = vector.broadcast %cst_11 : f32 to vector<16x16xf32>
    %14 = arith.mulf %13, %12 : vector<16x16xf32>
    %15 = math.exp %14 : vector<16x16xf32>
    %c0_12 = arith.constant 0 : index
    %c0_13 = arith.constant 0 : index
    %16 = vector.load %arg6[%c0_12, %c0_13] : memref<16x16xf32, #tpu.memory_space<vmem>>, vector<16x16xf32>
    %17 = arith.mulf %16, %15 : vector<16x16xf32>
    %18 = arith.addf %5, %17 : vector<16x16xf32>
    %c0_14 = arith.constant 0 : index
    %c0_15 = arith.constant 0 : index
    %19 = vector.load %arg7[%c0_14, %c0_15] : memref<16x16xf32, #tpu.memory_space<vmem>>, vector<16x16xf32>
    tpu.vector_store %arg7[%c0_14, %c0_15], %18 {strides = array<i32>} : memref<16x16xf32, #tpu.memory_space<vmem>>, vector<16x16xf32>,
    %20 = arith.mulf %15, %15 : vector<16x16xf32>
    %21 = arith.mulf %5, %5 : vector<16x16xf32>
    %22 = arith.addf %20, %21 : vector<16x16xf32>
    %cst_16 = arith.constant 9.99999993E-9 : f32
    %23 = vector.broadcast %cst_16 : f32 to vector<16x16xf32>
    %24 = arith.addf %15, %23 : vector<16x16xf32>
    %25 = math.log %24 : vector<16x16xf32>
    %26 = arith.subf %22, %25 : vector<16x16xf32>
    %cst_17 = arith.constant 5.000000e-01 : f32
    %27 = vector.broadcast %cst_17 : f32 to vector<16x16xf32>
    %28 = arith.subf %26, %27 : vector<16x16xf32>
    %29 = tpu.iota {dimensions = array<i32: 0>} : vector<16x16xi32>
    %c16_i32 = arith.constant 16 : i32
    %30 = arith.muli %arg0, %c16_i32 : i32
    %31 = vector.broadcast %30 : i32 to vector<16x16xi32>
    %32 = arith.addi %29, %31 : vector<16x16xi32>
    %c16_i32_18 = arith.constant 16 : i32
    %33 = vector.broadcast %c16_i32_18 : i32 to vector<16x16xi32>
    %34 = arith.cmpi slt, %32, %33 : vector<16x16xi32>
    %cst_19 = arith.constant 0.000000e+00 : f32
    %35 = vector.broadcast %cst_19 : f32 to vector<16x16xf32>
    %36 = arith.select %34, %28, %35 : vector<16x16xi1>, vector<16x16xf32>
    %37 = vector.shape_cast %36 : vector<16x16xf32> to vector<1x16x16xf32>
    %cst_20 = arith.constant dense<0.000000e+00> : vector<1xf32>
    %38 = vector.multi_reduction <add>, %37, %cst_20 [1, 2] : vector<1x16x16xf32> to vector<1xf32>
    %39 = vector.shape_cast %38 : vector<1xf32> to vector<1x1x1xf32>
    %40 = vector.extract %39[0, 0, 0] : f32 from vector<1x1x1xf32>
    %41 = tpu.iota {dimensions = array<i32: 1>} : vector<1x8x128xi32>
    %42 = tpu.iota {dimensions = array<i32: 2>} : vector<1x8x128xi32>
    %c0_i32 = arith.constant 0 : i32
    %43 = vector.broadcast %c0_i32 : i32 to vector<1x8x128xi32>
    %44 = arith.cmpi eq, %41, %43 : vector<1x8x128xi32>
    %c0_i32_21 = arith.constant 0 : i32
    %45 = vector.broadcast %c0_i32_21 : i32 to vector<1x8x128xi32>
    %46 = arith.cmpi eq, %42, %45 : vector<1x8x128xi32>
    %47 = arith.andi %44, %46 : vector<1x8x128xi1>
    %cst_22 = arith.constant 0.000000e+00 : f32
    %48 = vector.broadcast %40 : f32 to vector<1x8x128xf32>
    %49 = vector.broadcast %cst_22 : f32 to vector<1x8x128xf32>
    %50 = arith.select %47, %48, %49 : vector<1x8x128xi1>, vector<1x8x128xf32>
    %c0_23 = arith.constant 0 : index
    %c0_24 = arith.constant 0 : index
    %c0_25 = arith.constant 0 : index
    %51 = vector.load %arg8[%c0_23, %c0_24, %c0_25] : memref<1x8x128xf32, #tpu.memory_space<vmem>>, vector<1x8x128xf32>
    tpu.vector_store %arg8[%c0_23, %c0_24, %c0_25], %50 {strides = array<i32>} : memref<1x8x128xf32, #tpu.memory_space<vmem>>, vector<1x8x128xf32>,
    return
  }
  func.func @transform_0(%arg0: i32) -> (i32, i32) {
    %c0_i32 = arith.constant 0 : i32
    %c0_i32_0 = arith.constant 0 : i32
    return %arg0, %c0_i32 : i32, i32
  }
  func.func @transform_1(%arg0: i32) -> (i32, i32) {
    %c0_i32 = arith.constant 0 : i32
    %c0_i32_0 = arith.constant 0 : i32
    %c0_i32_1 = arith.constant 0 : i32
    return %c0_i32, %c0_i32_0 : i32, i32
  }
  func.func @transform_2(%arg0: i32) -> (i32, i32) {
    %c0_i32 = arith.constant 0 : i32
    %c0_i32_0 = arith.constant 0 : i32
    %c0_i32_1 = arith.constant 0 : i32
    return %c0_i32, %c0_i32_0 : i32, i32
  }
  func.func @transform_3(%arg0: i32) -> (i32, i32) {
    %c0_i32 = arith.constant 0 : i32
    %c0_i32_0 = arith.constant 0 : i32
    %c0_i32_1 = arith.constant 0 : i32
    return %c0_i32, %c0_i32_0 : i32, i32
  }
  func.func @transform_4(%arg0: i32) -> (i32, i32) {
    %c0_i32 = arith.constant 0 : i32
    %c0_i32_0 = arith.constant 0 : i32
    %c0_i32_1 = arith.constant 0 : i32
    return %c0_i32, %c0_i32_0 : i32, i32
  }
  func.func @transform_5(%arg0: i32) -> (i32, i32) {
    %c0_i32 = arith.constant 0 : i32
    %c0_i32_0 = arith.constant 0 : i32
    return %arg0, %c0_i32 : i32, i32
  }
  func.func @transform_6(%arg0: i32) -> (i32, i32) {
    %c0_i32 = arith.constant 0 : i32
    %c0_i32_0 = arith.constant 0 : i32
    return %arg0, %c0_i32 : i32, i32
  }
  func.func @transform_7(%arg0: i32) -> (i32, i32, i32) {
    %c0_i32 = arith.constant 0 : i32
    %c0_i32_0 = arith.constant 0 : i32
    %c0_i32_1 = arith.constant 0 : i32
    return %arg0, %c0_i32, %c0_i32_0 : i32, i32, i32
  }
}

</mosaic_0001>

<llo_original>
// kernel: encoder_forward.5
$region0: #{encoder_forward.5}
  #allocation0 [shape = 'u32[]', space=smem, size = 0x4, offset = 0x4, fixed_abs, tag = 'smem constant byte address 0x4 - core index']
  #allocation1 [shape = 'u32[144,128]{1,0:T(1,128)}', space=vmem, size = 0x12000, scoped, tag = 'internal scratch']
  %s0 = inlined_call_operand.vmem [shape: bf16[128,135], index: 0, kind: input, shape index: {}]
  %s1 = inlined_call_operand.vmem [shape: bf16[135,8], index: 1, kind: input, shape index: {}]
  %s2 = inlined_call_operand.vmem [shape: f32[1,8], index: 2, kind: input, shape index: {}]
  %s3 = inlined_call_operand.vmem [shape: bf16[128,8], index: 3, kind: output, shape index: {}]
  %s4 = sld [smem:[#allocation0]]
  $region22: #{encoder_forward.5} parent=0
    _
  %s6 = ssub.s32 1, %s4
  %s7 = scalar_select 0, %s6, %s4
  // Predicated region
  $region2: #{encoder_forward.5} parent=0 // pred_check
    _
  $region3: #{encoder_forward.5} parent=0 // pred_check_branch
    %9 = sbr.rel (0) target = $region5
  $region4: #{encoder_forward.5} parent=0 // pred_region
    _
  $region5: #{encoder_forward.5} parent=0 // pred_fallthru
    _
  // Predicated region
  $region6: #{encoder_forward.5} parent=0 // pred_check
    _
  $region7: #{encoder_forward.5} parent=0 // pred_check_branch
    %11 = sbr.rel (0) target = $region9
  $region8: #{encoder_forward.5} parent=0 // pred_region
    _
  $region9: #{encoder_forward.5} parent=0 // pred_fallthru
    _
  // Predicated region
  $region10: #{encoder_forward.5} parent=0 // pred_check
    _
  $region11: #{encoder_forward.5} parent=0 // pred_check_branch
    %13 = sbr.rel (0) target = $region13
  $region12: #{encoder_forward.5} parent=0 // pred_region
    _
  $region13: #{encoder_forward.5} parent=0 // pred_fallthru
    _
  %v15 = vld [vmem:[%s0] sm:$0xff]
  %v16 = vld [vmem:[%s0 + $0x8] sm:$0xff]
  %v17 = vld [vmem:[%s0 + $0x10] sm:$0xff]
  %v18 = vld [vmem:[%s0 + $0x18] sm:$0xff]
  %v19 = vld [vmem:[%s0 + $0x20] sm:$0xff]
  %v20 = vld [vmem:[%s0 + $0x28] sm:$0xff]
  %v21 = vld [vmem:[%s0 + $0x30] sm:$0xff]
  %v22 = vld [vmem:[%s0 + $0x38] sm:$0xff]
  %v23 = vld [vmem:[%s0 + $0x40] sm:$0xff]
  %v24 = vld [vmem:[%s0 + $0x48] sm:$0xff]
  %v25 = vld [vmem:[%s0 + $0x50] sm:$0xff]
  %v26 = vld [vmem:[%s0 + $0x58] sm:$0xff]
  %v27 = vld [vmem:[%s0 + $0x60] sm:$0xff]
  %v28 = vld [vmem:[%s0 + $0x68] sm:$0xff]
  %v29 = vld [vmem:[%s0 + $0x70] sm:$0xff]
  %v30 = vld [vmem:[%s0 + $0x78] sm:$0xff]
  %v31 = vld [vmem:[%s1] sm:$0xf]
  %v32 = vld [vmem:[%s1 + $0x4] sm:$0xf]
  %v33 = vld [vmem:[%s1 + $0x8] sm:$0xf]
  %v34 = vld [vmem:[%s1 + $0xc] sm:$0xf]
  %v35 = vld [vmem:[%s1 + $0x10] sm:$0xf]
  %v36 = vld [vmem:[%s1 + $0x14] sm:$0xf]
  %v37 = vld [vmem:[%s1 + $0x18] sm:$0xf]
  %v38 = vld [vmem:[%s1 + $0x1c] sm:$0xf]
  %v39 = vld [vmem:[%s1 + $0x20] sm:$0xf]
  %v40 = vld [vmem:[%s1 + $0x24] sm:$0xf]
  %v41 = vld [vmem:[%s1 + $0x28] sm:$0xf]
  %v42 = vld [vmem:[%s1 + $0x2c] sm:$0xf]
  %v43 = vld [vmem:[%s1 + $0x30] sm:$0xf]
  %v44 = vld [vmem:[%s1 + $0x34] sm:$0xf]
  %v45 = vld [vmem:[%s1 + $0x38] sm:$0xf]
  %v46 = vld [vmem:[%s1 + $0x3c] sm:$0xf]
  %v47 = vld [vmem:[%s1 + $0x40] sm:$0xf]
  %v48 = vld [vmem:[%s2] sm:$0x1]
  %v50 = vlaneseq
  %v51 = vshrl.u32 %v50, 7
  %v52 = vsub.s32 0, %v51
  %v53 = vrot.slane %v48, %v52
  %v71 = vunpack.c.l.b16 %v15
  %v72 = vunpack.c.h.b16 %v15
  %v73 = vunpack.c.l.b16 %v16
  %v74 = vunpack.c.h.b16 %v16
  %v75 = vunpack.c.l.b16 %v17
  %v76 = vunpack.c.h.b16 %v17
  %v77 = vunpack.c.l.b16 %v18
  %v78 = vunpack.c.h.b16 %v18
  %v79 = vunpack.c.l.b16 %v19
  %v80 = vunpack.c.h.b16 %v19
  %v81 = vunpack.c.l.b16 %v20
  %v82 = vunpack.c.h.b16 %v20
  %v83 = vunpack.c.l.b16 %v21
  %v84 = vunpack.c.h.b16 %v21
  %v85 = vunpack.c.l.b16 %v22
  %v86 = vunpack.c.h.b16 %v22
  %v87 = vunpack.c.l.b16 %v23
  %v88 = vunpack.c.h.b16 %v23
  %v89 = vunpack.c.l.b16 %v24
  %v90 = vunpack.c.h.b16 %v24
  %v91 = vunpack.c.l.b16 %v25
  %v92 = vunpack.c.h.b16 %v25
  %v93 = vunpack.c.l.b16 %v26
  %v94 = vunpack.c.h.b16 %v26
  %v95 = vunpack.c.l.b16 %v27
  %v96 = vunpack.c.h.b16 %v27
  %v97 = vunpack.c.l.b16 %v28
  %v98 = vunpack.c.h.b16 %v28
  %v99 = vunpack.c.l.b16 %v29
  %v100 = vunpack.c.h.b16 %v29
  %v101 = vunpack.c.l.b16 %v30
  %v102 = vunpack.c.h.b16 %v30
  %v103 = vpack.c.b16 %v73, %v71
  %v104 = vpack.c.b16 %v74, %v72
  %v105 = vpack.c.b16 %v77, %v75
  %v106 = vpack.c.b16 %v78, %v76
  %v107 = vpack.c.b16 %v81, %v79
  %v108 = vpack.c.b16 %v82, %v80
  %v109 = vpack.c.b16 %v85, %v83
  %v110 = vpack.c.b16 %v86, %v84
  %v111 = vpack.c.b16 %v89, %v87
  %v112 = vpack.c.b16 %v90, %v88
  %v113 = vpack.c.b16 %v93, %v91
  %v114 = vpack.c.b16 %v94, %v92
  %v115 = vpack.c.b16 %v97, %v95
  %v116 = vpack.c.b16 %v98, %v96
  %v117 = vpack.c.b16 %v101, %v99
  %v118 = vpack.c.b16 %v102, %v100
  %v144 = vunpack.c.l.b16 %v31
  %v145 = vunpack.c.l.b16 %v32
  %v146 = vunpack.c.l.b16 %v33
  %v147 = vunpack.c.l.b16 %v34
  %v148 = vunpack.c.l.b16 %v35
  %v149 = vunpack.c.l.b16 %v36
  %v150 = vunpack.c.l.b16 %v37
  %v151 = vunpack.c.l.b16 %v38
  %v152 = vunpack.c.l.b16 %v39
  %v153 = vunpack.c.l.b16 %v40
  %v154 = vunpack.c.l.b16 %v41
  %v155 = vunpack.c.l.b16 %v42
  %v156 = vunpack.c.l.b16 %v43
  %v157 = vunpack.c.l.b16 %v44
  %v158 = vunpack.c.l.b16 %v45
  %v159 = vunpack.c.l.b16 %v46
  %v160 = vunpack.c.l.b16 %v47
  %v161 = vpack.c.b16 %v145, %v144
  %v162 = vpack.c.b16 %v147, %v146
  %v163 = vpack.c.b16 %v149, %v148
  %v164 = vpack.c.b16 %v151, %v150
  %v165 = vpack.c.b16 %v153, %v152
  %v166 = vpack.c.b16 %v155, %v154
  %v167 = vpack.c.b16 %v157, %v156
  %v168 = vpack.c.b16 %v159, %v158
  %v169 = vpack.c.b16 %v160, %v160
  %vm178 = vcmask 56320
  %v180 = vsel %vm178, %v104, 0
  %v183 = vsel %vm178, %v106, 0
  %v186 = vsel %vm178, %v108, 0
  %v189 = vsel %vm178, %v110, 0
  %v192 = vsel %vm178, %v112, 0
  %v195 = vsel %vm178, %v114, 0
  %v198 = vsel %vm178, %v116, 0
  %v201 = vsel %vm178, %v118, 0
  %vm203 = vcmask 1042432
  %vm204 = vcmask 1043456
  %v205 = vsel %vm203, 4294967295, 65535
  %v206 = vsel %vm204, %v205, 0
  %v208 = vand.u32 %v169, %v206
  %210 = vmatprep.subr.bf16.mxu0 0
  %211 = vmatpush1.bf16.msra.mxu0 %v168
  %212 = vmatprep.subr.bf16.mxu0 0
  %213 = vmatpush1.bf16.msra.mxu0 %v167
  %214 = vmatprep.subr.bf16.mxu0 0
  %215 = vmatpush1.bf16.msra.mxu0 %v166
  %216 = vmatprep.subr.bf16.mxu0 0
  %217 = vmatpush1.bf16.msra.mxu0 %v165
  %218 = vmatprep.subr.bf16.mxu0 0
  %219 = vmatpush1.bf16.msra.mxu0 %v164
  %220 = vmatprep.subr.bf16.mxu0 0
  %221 = vmatpush1.bf16.msra.mxu0 %v163
  %222 = vmatprep.subr.bf16.mxu0 0
  %223 = vmatpush1.bf16.msra.mxu0 %v162
  %224 = vmatprep.subr.bf16.mxu0 0
  %225 = vmatpush1.bf16.msra.mxu0 %v161
  %226 = vmatprep.subr.bf16.mxu0 0
  %227 = vmatpush2.bf16.msra.mxu0 0
  %228 = vmatprep.subr.bf16.mxu0 0
  %229 = vmatpush2.bf16.msra.mxu0 0
  %230 = vmatprep.subr.bf16.mxu0 0
  %231 = vmatpush2.bf16.msra.mxu0 0
  %232 = vmatprep.subr.bf16.mxu0 0
  %233 = vmatpush2.bf16.msra.mxu0 0
  %234 = vmatprep.subr.bf16.mxu0 0
  %235 = vmatpush2.bf16.msra.mxu0 0
  %236 = vmatprep.subr.bf16.mxu0 0
  %237 = vmatpush2.bf16.msra.mxu0 0
  %238 = vmatprep.subr.bf16.mxu0 0
  %239 = vmatpush2.bf16.msra.mxu0 0
  %240 = vmatprep.subr.bf16.mxu0 0
  %241 = vmatpush2.bf16.msra.mxu0 %v208
  %242 = vmatprep.mubr.bf16.mxu0 %v180
  %243 = vmatmul.mubr.bf16.gmra.mxu0 %v103
  %v244 = vpop.f32.mrf.mxu0
  %v245 = vadd.f32 %v53, %v244
  %v246 = vpop.f32.mrf.mxu0
  %v247 = vpop.f32.mrf.mxu0
  %v248 = vadd.f32 %v53, %v247
  %v249 = vpop.f32.mrf.mxu0
  %250 = vmatprep.mubr.bf16.mxu0 %v183
  %251 = vmatmul.mubr.bf16.gmra.mxu0 %v105
  %v252 = vpop.f32.mrf.mxu0
  %v253 = vadd.f32 %v53, %v252
  %v254 = vpop.f32.mrf.mxu0
  %v255 = vpop.f32.mrf.mxu0
  %v256 = vadd.f32 %v53, %v255
  %v257 = vpop.f32.mrf.mxu0
  %258 = vmatprep.mubr.bf16.mxu0 %v186
  %259 = vmatmul.mubr.bf16.gmra.mxu0 %v107
  %v260 = vpop.f32.mrf.mxu0
  %v261 = vadd.f32 %v53, %v260
  %v262 = vpop.f32.mrf.mxu0
  %v263 = vpop.f32.mrf.mxu0
  %v264 = vadd.f32 %v53, %v263
  %v265 = vpop.f32.mrf.mxu0
  %266 = vmatprep.mubr.bf16.mxu0 %v189
  %267 = vmatmul.mubr.bf16.gmra.mxu0 %v109
  %v268 = vpop.f32.mrf.mxu0
  %v269 = vadd.f32 %v53, %v268
  %v270 = vpop.f32.mrf.mxu0
  %v271 = vpop.f32.mrf.mxu0
  %v272 = vadd.f32 %v53, %v271
  %v273 = vpop.f32.mrf.mxu0
  %274 = vmatprep.mubr.bf16.mxu0 %v192
  %275 = vmatmul.mubr.bf16.gmra.mxu0 %v111
  %v276 = vpop.f32.mrf.mxu0
  %v277 = vadd.f32 %v53, %v276
  %v278 = vpop.f32.mrf.mxu0
  %v279 = vpop.f32.mrf.mxu0
  %v280 = vadd.f32 %v53, %v279
  %v281 = vpop.f32.mrf.mxu0
  %282 = vmatprep.mubr.bf16.mxu0 %v195
  %283 = vmatmul.mubr.bf16.gmra.mxu0 %v113
  %v284 = vpop.f32.mrf.mxu0
  %v285 = vadd.f32 %v53, %v284
  %v286 = vpop.f32.mrf.mxu0
  %v287 = vpop.f32.mrf.mxu0
  %v288 = vadd.f32 %v53, %v287
  %v289 = vpop.f32.mrf.mxu0
  %290 = vmatprep.mubr.bf16.mxu0 %v198
  %291 = vmatmul.mubr.bf16.gmra.mxu0 %v115
  %v292 = vpop.f32.mrf.mxu0
  %v293 = vadd.f32 %v53, %v292
  %v294 = vpop.f32.mrf.mxu0
  %v295 = vpop.f32.mrf.mxu0
  %v296 = vadd.f32 %v53, %v295
  %v297 = vpop.f32.mrf.mxu0
  %298 = vmatprep.mubr.bf16.mxu0 %v201
  %299 = vmatmul.mubr.bf16.gmra.mxu0 %v117
  %v300 = vpop.f32.mrf.mxu0
  %v301 = vadd.f32 %v53, %v300
  %v302 = vpop.f32.mrf.mxu0
  %v303 = vpop.f32.mrf.mxu0
  %v304 = vadd.f32 %v53, %v303
  %v305 = vpop.f32.mrf.mxu0
  %306 = vdwg.mxu0
  %vm307 = vcmp.ge.f32.partialorder %v245, 0.0
  %vm308 = vcmp.ge.f32.partialorder %v248, 0.0
  %vm309 = vcmp.ge.f32.partialorder %v253, 0.0
  %vm310 = vcmp.ge.f32.partialorder %v256, 0.0
  %vm311 = vcmp.ge.f32.partialorder %v261, 0.0
  %vm312 = vcmp.ge.f32.partialorder %v264, 0.0
  %vm313 = vcmp.ge.f32.partialorder %v269, 0.0
  %vm314 = vcmp.ge.f32.partialorder %v272, 0.0
  %vm315 = vcmp.ge.f32.partialorder %v277, 0.0
  %vm316 = vcmp.ge.f32.partialorder %v280, 0.0
  %vm317 = vcmp.ge.f32.partialorder %v285, 0.0
  %vm318 = vcmp.ge.f32.partialorder %v288, 0.0
  %vm319 = vcmp.ge.f32.partialorder %v293, 0.0
  %vm320 = vcmp.ge.f32.partialorder %v296, 0.0
  %vm321 = vcmp.ge.f32.partialorder %v301, 0.0
  %vm322 = vcmp.ge.f32.partialorder %v304, 0.0
  %v323 = vmul.f32 %v245, 0.1
  %v324 = vmul.f32 %v248, 0.1
  %v325 = vmul.f32 %v253, 0.1
  %v326 = vmul.f32 %v256, 0.1
  %v327 = vmul.f32 %v261, 0.1
  %v328 = vmul.f32 %v264, 0.1
  %v329 = vmul.f32 %v269, 0.1
  %v330 = vmul.f32 %v272, 0.1
  %v331 = vmul.f32 %v277, 0.1
  %v332 = vmul.f32 %v280, 0.1
  %v333 = vmul.f32 %v285, 0.1
  %v334 = vmul.f32 %v288, 0.1
  %v335 = vmul.f32 %v293, 0.1
  %v336 = vmul.f32 %v296, 0.1
  %v337 = vmul.f32 %v301, 0.1
  %v338 = vmul.f32 %v304, 0.1
  %v339 = vsel %vm307, %v245, %v323
  %v340 = vsel %vm308, %v248, %v324
  %v341 = vsel %vm309, %v253, %v325
  %v342 = vsel %vm310, %v256, %v326
  %v343 = vsel %vm311, %v261, %v327
  %v344 = vsel %vm312, %v264, %v328
  %v345 = vsel %vm313, %v269, %v329
  %v346 = vsel %vm314, %v272, %v330
  %v347 = vsel %vm315, %v277, %v331
  %v348 = vsel %vm316, %v280, %v332
  %v349 = vsel %vm317, %v285, %v333
  %v350 = vsel %vm318, %v288, %v334
  %v351 = vsel %vm319, %v293, %v335
  %v352 = vsel %vm320, %v296, %v336
  %v353 = vsel %vm321, %v301, %v337
  %v354 = vsel %vm322, %v304, %v338
  %v355 = vpack.c.bf16 %v340, %v339
  %v356 = vpack.c.bf16 %v342, %v341
  %v357 = vpack.c.bf16 %v344, %v343
  %v358 = vpack.c.bf16 %v346, %v345
  %v359 = vpack.c.bf16 %v348, %v347
  %v360 = vpack.c.bf16 %v350, %v349
  %v361 = vpack.c.bf16 %v352, %v351
  %v362 = vpack.c.bf16 %v354, %v353
  %v371 = vunpack.c.l.b16 %v355
  %v372 = vunpack.c.h.b16 %v355
  %v373 = vunpack.c.l.b16 %v356
  %v374 = vunpack.c.h.b16 %v356
  %v375 = vunpack.c.l.b16 %v357
  %v376 = vunpack.c.h.b16 %v357
  %v377 = vunpack.c.l.b16 %v358
  %v378 = vunpack.c.h.b16 %v358
  %v379 = vunpack.c.l.b16 %v359
  %v380 = vunpack.c.h.b16 %v359
  %v381 = vunpack.c.l.b16 %v360
  %v382 = vunpack.c.h.b16 %v360
  %v383 = vunpack.c.l.b16 %v361
  %v384 = vunpack.c.h.b16 %v361
  %v385 = vunpack.c.l.b16 %v362
  %v386 = vunpack.c.h.b16 %v362
  %v387 = vpack.c.b16 %v371, %v371
  %v388 = vpack.c.b16 %v372, %v372
  %v389 = vpack.c.b16 %v373, %v373
  %v390 = vpack.c.b16 %v374, %v374
  %v391 = vpack.c.b16 %v375, %v375
  %v392 = vpack.c.b16 %v376, %v376
  %v393 = vpack.c.b16 %v377, %v377
  %v394 = vpack.c.b16 %v378, %v378
  %v395 = vpack.c.b16 %v379, %v379
  %v396 = vpack.c.b16 %v380, %v380
  %v397 = vpack.c.b16 %v381, %v381
  %v398 = vpack.c.b16 %v382, %v382
  %v399 = vpack.c.b16 %v383, %v383
  %v400 = vpack.c.b16 %v384, %v384
  %v401 = vpack.c.b16 %v385, %v385
  %v402 = vpack.c.b16 %v386, %v386
  %vm419 = vcmask 60416
  %420 = vst.msk [vmem:[%s3] sm:$0xf] %vm419, %v387
  %421 = vst.msk [vmem:[%s3 + $0x4] sm:$0xf] %vm419, %v388
  %422 = vst.msk [vmem:[%s3 + $0x8] sm:$0xf] %vm419, %v389
  %423 = vst.msk [vmem:[%s3 + $0xc] sm:$0xf] %vm419, %v390
  %424 = vst.msk [vmem:[%s3 + $0x10] sm:$0xf] %vm419, %v391
  %425 = vst.msk [vmem:[%s3 + $0x14] sm:$0xf] %vm419, %v392
  %426 = vst.msk [vmem:[%s3 + $0x18] sm:$0xf] %vm419, %v393
  %427 = vst.msk [vmem:[%s3 + $0x1c] sm:$0xf] %vm419, %v394
  %428 = vst.msk [vmem:[%s3 + $0x20] sm:$0xf] %vm419, %v395
  %429 = vst.msk [vmem:[%s3 + $0x24] sm:$0xf] %vm419, %v396
  %430 = vst.msk [vmem:[%s3 + $0x28] sm:$0xf] %vm419, %v397
  %431 = vst.msk [vmem:[%s3 + $0x2c] sm:$0xf] %vm419, %v398
  %432 = vst.msk [vmem:[%s3 + $0x30] sm:$0xf] %vm419, %v399
  %433 = vst.msk [vmem:[%s3 + $0x34] sm:$0xf] %vm419, %v400
  %434 = vst.msk [vmem:[%s3 + $0x38] sm:$0xf] %vm419, %v401
  %435 = vst.msk [vmem:[%s3 + $0x3c] sm:$0xf] %vm419, %v402
  // Predicated region
  $region14: #{encoder_forward.5} parent=0 // pred_check
    _
  $region15: #{encoder_forward.5} parent=0 // pred_check_branch
    %437 = sbr.rel (0) target = $region17
  $region16: #{encoder_forward.5} parent=0 // pred_region
    _
  $region17: #{encoder_forward.5} parent=0 // pred_fallthru
    _
  // Predicated region
  $region18: #{encoder_forward.5} parent=0 // pred_check
    _
  $region19: #{encoder_forward.5} parent=0 // pred_check_branch
    %439 = sbr.rel (0) target = $region21
  $region20: #{encoder_forward.5} parent=0 // pred_region
    _
  $region21: #{encoder_forward.5} parent=0 // pred_fallthru
    _

// kernel: encoder_forward.6
$region0: #{encoder_forward.6}
  #allocation0 [shape = 'u32[]', space=smem, size = 0x4, offset = 0x4, fixed_abs, tag = 'smem constant byte address 0x4 - core index']
  #allocation1 [shape = 'u32[144,128]{1,0:T(1,128)}', space=vmem, size = 0x12000, scoped, tag = 'internal scratch']
  %s0 = inlined_call_operand.vmem [shape: bf16[128,216], index: 0, kind: input, shape index: {}]
  %s1 = inlined_call_operand.vmem [shape: bf16[216,8], index: 1, kind: input, shape index: {}]
  %s2 = inlined_call_operand.vmem [shape: f32[1,8], index: 2, kind: input, shape index: {}]
  %s3 = inlined_call_operand.vmem [shape: bf16[128,8], index: 3, kind: output, shape index: {}]
  %s4 = sld [smem:[#allocation0]]
  $region22: #{encoder_forward.6} parent=0
    _
  %s6 = ssub.s32 1, %s4
  %s7 = scalar_select 0, %s6, %s4
  // Predicated region
  $region2: #{encoder_forward.6} parent=0 // pred_check
    _
  $region3: #{encoder_forward.6} parent=0 // pred_check_branch
    %9 = sbr.rel (0) target = $region5
  $region4: #{encoder_forward.6} parent=0 // pred_region
    _
  $region5: #{encoder_forward.6} parent=0 // pred_fallthru
    _
  // Predicated region
  $region6: #{encoder_forward.6} parent=0 // pred_check
    _
  $region7: #{encoder_forward.6} parent=0 // pred_check_branch
    %11 = sbr.rel (0) target = $region9
  $region8: #{encoder_forward.6} parent=0 // pred_region
    _
  $region9: #{encoder_forward.6} parent=0 // pred_fallthru
    _
  // Predicated region
  $region10: #{encoder_forward.6} parent=0 // pred_check
    _
  $region11: #{encoder_forward.6} parent=0 // pred_check_branch
    %13 = sbr.rel (0) target = $region13
  $region12: #{encoder_forward.6} parent=0 // pred_region
    _
  $region13: #{encoder_forward.6} parent=0 // pred_fallthru
    _
  %v15 = vld [vmem:[%s0] sm:$0xff]
  %v16 = vld [vmem:[%s0 + $0x8] sm:$0xff]
  %v17 = vld [vmem:[%s0 + $0x10] sm:$0xff]
  %v18 = vld [vmem:[%s0 + $0x18] sm:$0xff]
  %v19 = vld [vmem:[%s0 + $0x20] sm:$0xff]
  %v20 = vld [vmem:[%s0 + $0x28] sm:$0xff]
  %v21 = vld [vmem:[%s0 + $0x30] sm:$0xff]
  %v22 = vld [vmem:[%s0 + $0x38] sm:$0xff]
  %v23 = vld [vmem:[%s0 + $0x40] sm:$0xff]
  %v24 = vld [vmem:[%s0 + $0x48] sm:$0xff]
  %v25 = vld [vmem:[%s0 + $0x50] sm:$0xff]
  %v26 = vld [vmem:[%s0 + $0x58] sm:$0xff]
  %v27 = vld [vmem:[%s0 + $0x60] sm:$0xff]
  %v28 = vld [vmem:[%s0 + $0x68] sm:$0xff]
  %v29 = vld [vmem:[%s0 + $0x70] sm:$0xff]
  %v30 = vld [vmem:[%s0 + $0x78] sm:$0xff]
  %v31 = vld [vmem:[%s1] sm:$0xf]
  %v32 = vld [vmem:[%s1 + $0x4] sm:$0xf]
  %v33 = vld [vmem:[%s1 + $0x8] sm:$0xf]
  %v34 = vld [vmem:[%s1 + $0xc] sm:$0xf]
  %v35 = vld [vmem:[%s1 + $0x10] sm:$0xf]
  %v36 = vld [vmem:[%s1 + $0x14] sm:$0xf]
  %v37 = vld [vmem:[%s1 + $0x18] sm:$0xf]
  %v38 = vld [vmem:[%s1 + $0x1c] sm:$0xf]
  %v39 = vld [vmem:[%s1 + $0x20] sm:$0xf]
  %v40 = vld [vmem:[%s1 + $0x24] sm:$0xf]
  %v41 = vld [vmem:[%s1 + $0x28] sm:$0xf]
  %v42 = vld [vmem:[%s1 + $0x2c] sm:$0xf]
  %v43 = vld [vmem:[%s1 + $0x30] sm:$0xf]
  %v44 = vld [vmem:[%s1 + $0x34] sm:$0xf]
  %v45 = vld [vmem:[%s1 + $0x38] sm:$0xf]
  %v46 = vld [vmem:[%s1 + $0x3c] sm:$0xf]
  %v47 = vld [vmem:[%s1 + $0x40] sm:$0xf]
  %v48 = vld [vmem:[%s1 + $0x44] sm:$0xf]
  %v49 = vld [vmem:[%s1 + $0x48] sm:$0xf]
  %v50 = vld [vmem:[%s1 + $0x4c] sm:$0xf]
  %v51 = vld [vmem:[%s1 + $0x50] sm:$0xf]
  %v52 = vld [vmem:[%s1 + $0x54] sm:$0xf]
  %v53 = vld [vmem:[%s1 + $0x58] sm:$0xf]
  %v54 = vld [vmem:[%s1 + $0x5c] sm:$0xf]
  %v55 = vld [vmem:[%s1 + $0x60] sm:$0xf]
  %v56 = vld [vmem:[%s1 + $0x64] sm:$0xf]
  %v57 = vld [vmem:[%s1 + $0x68] sm:$0xf]
  %v58 = vld [vmem:[%s2] sm:$0x1]
  %v60 = vlaneseq
  %v61 = vshrl.u32 %v60, 7
  %v62 = vsub.s32 0, %v61
  %v63 = vrot.slane %v58, %v62
  %v81 = vunpack.c.l.b16 %v15
  %v82 = vunpack.c.h.b16 %v15
  %v83 = vunpack.c.l.b16 %v16
  %v84 = vunpack.c.h.b16 %v16
  %v85 = vunpack.c.l.b16 %v17
  %v86 = vunpack.c.h.b16 %v17
  %v87 = vunpack.c.l.b16 %v18
  %v88 = vunpack.c.h.b16 %v18
  %v89 = vunpack.c.l.b16 %v19
  %v90 = vunpack.c.h.b16 %v19
  %v91 = vunpack.c.l.b16 %v20
  %v92 = vunpack.c.h.b16 %v20
  %v93 = vunpack.c.l.b16 %v21
  %v94 = vunpack.c.h.b16 %v21
  %v95 = vunpack.c.l.b16 %v22
  %v96 = vunpack.c.h.b16 %v22
  %v97 = vunpack.c.l.b16 %v23
  %v98 = vunpack.c.h.b16 %v23
  %v99 = vunpack.c.l.b16 %v24
  %v100 = vunpack.c.h.b16 %v24
  %v101 = vunpack.c.l.b16 %v25
  %v102 = vunpack.c.h.b16 %v25
  %v103 = vunpack.c.l.b16 %v26
  %v104 = vunpack.c.h.b16 %v26
  %v105 = vunpack.c.l.b16 %v27
  %v106 = vunpack.c.h.b16 %v27
  %v107 = vunpack.c.l.b16 %v28
  %v108 = vunpack.c.h.b16 %v28
  %v109 = vunpack.c.l.b16 %v29
  %v110 = vunpack.c.h.b16 %v29
  %v111 = vunpack.c.l.b16 %v30
  %v112 = vunpack.c.h.b16 %v30
  %v113 = vpack.c.b16 %v83, %v81
  %v114 = vpack.c.b16 %v84, %v82
  %v115 = vpack.c.b16 %v87, %v85
  %v116 = vpack.c.b16 %v88, %v86
  %v117 = vpack.c.b16 %v91, %v89
  %v118 = vpack.c.b16 %v92, %v90
  %v119 = vpack.c.b16 %v95, %v93
  %v120 = vpack.c.b16 %v96, %v94
  %v121 = vpack.c.b16 %v99, %v97
  %v122 = vpack.c.b16 %v100, %v98
  %v123 = vpack.c.b16 %v103, %v101
  %v124 = vpack.c.b16 %v104, %v102
  %v125 = vpack.c.b16 %v107, %v105
  %v126 = vpack.c.b16 %v108, %v106
  %v127 = vpack.c.b16 %v111, %v109
  %v128 = vpack.c.b16 %v112, %v110
  %v164 = vunpack.c.l.b16 %v31
  %v165 = vunpack.c.l.b16 %v32
  %v166 = vunpack.c.l.b16 %v33
  %v167 = vunpack.c.l.b16 %v34
  %v168 = vunpack.c.l.b16 %v35
  %v169 = vunpack.c.l.b16 %v36
  %v170 = vunpack.c.l.b16 %v37
  %v171 = vunpack.c.l.b16 %v38
  %v172 = vunpack.c.l.b16 %v39
  %v173 = vunpack.c.l.b16 %v40
  %v174 = vunpack.c.l.b16 %v41
  %v175 = vunpack.c.l.b16 %v42
  %v176 = vunpack.c.l.b16 %v43
  %v177 = vunpack.c.l.b16 %v44
  %v178 = vunpack.c.l.b16 %v45
  %v179 = vunpack.c.l.b16 %v46
  %v180 = vunpack.c.l.b16 %v47
  %v181 = vunpack.c.l.b16 %v48
  %v182 = vunpack.c.l.b16 %v49
  %v183 = vunpack.c.l.b16 %v50
  %v184 = vunpack.c.l.b16 %v51
  %v185 = vunpack.c.l.b16 %v52
  %v186 = vunpack.c.l.b16 %v53
  %v187 = vunpack.c.l.b16 %v54
  %v188 = vunpack.c.l.b16 %v55
  %v189 = vunpack.c.l.b16 %v56
  %v190 = vunpack.c.l.b16 %v57
  %v191 = vpack.c.b16 %v165, %v164
  %v192 = vpack.c.b16 %v167, %v166
  %v193 = vpack.c.b16 %v169, %v168
  %v194 = vpack.c.b16 %v171, %v170
  %v195 = vpack.c.b16 %v173, %v172
  %v196 = vpack.c.b16 %v175, %v174
  %v197 = vpack.c.b16 %v177, %v176
  %v198 = vpack.c.b16 %v179, %v178
  %v199 = vpack.c.b16 %v181, %v180
  %v200 = vpack.c.b16 %v183, %v182
  %v201 = vpack.c.b16 %v185, %v184
  %v202 = vpack.c.b16 %v187, %v186
  %v203 = vpack.c.b16 %v189, %v188
  %v204 = vpack.c.b16 %v190, %v190
  %vm218 = vcmask 719872
  %v220 = vsel %vm218, %v114, 0
  %v223 = vsel %vm218, %v116, 0
  %v226 = vsel %vm218, %v118, 0
  %v229 = vsel %vm218, %v120, 0
  %v232 = vsel %vm218, %v122, 0
  %v235 = vsel %vm218, %v124, 0
  %v238 = vsel %vm218, %v126, 0
  %v241 = vsel %vm218, %v128, 0
  %vm243 = vcmask 1043456
  %v245 = vsel %vm243, %v204, 0
  %247 = vmatprep.subr.bf16.mxu0 0
  %248 = vmatpush1.bf16.msra.mxu0 %v198
  %249 = vmatprep.subr.bf16.mxu0 0
  %250 = vmatpush1.bf16.msra.mxu0 %v197
  %251 = vmatprep.subr.bf16.mxu0 0
  %252 = vmatpush1.bf16.msra.mxu0 %v196
  %253 = vmatprep.subr.bf16.mxu0 0
  %254 = vmatpush1.bf16.msra.mxu0 %v195
  %255 = vmatprep.subr.bf16.mxu0 0
  %256 = vmatpush1.bf16.msra.mxu0 %v194
  %257 = vmatprep.subr.bf16.mxu0 0
  %258 = vmatpush1.bf16.msra.mxu0 %v193
  %259 = vmatprep.subr.bf16.mxu0 0
  %260 = vmatpush1.bf16.msra.mxu0 %v192
  %261 = vmatprep.subr.bf16.mxu0 0
  %262 = vmatpush1.bf16.msra.mxu0 %v191
  %263 = vmatprep.subr.bf16.mxu0 0
  %264 = vmatpush2.bf16.msra.mxu0 0
  %265 = vmatprep.subr.bf16.mxu0 0
  %266 = vmatpush2.bf16.msra.mxu0 0
  %267 = vmatprep.subr.bf16.mxu0 0
  %268 = vmatpush2.bf16.msra.mxu0 %v245
  %269 = vmatprep.subr.bf16.mxu0 0
  %270 = vmatpush2.bf16.msra.mxu0 %v203
  %271 = vmatprep.subr.bf16.mxu0 0
  %272 = vmatpush2.bf16.msra.mxu0 %v202
  %273 = vmatprep.subr.bf16.mxu0 0
  %274 = vmatpush2.bf16.msra.mxu0 %v201
  %275 = vmatprep.subr.bf16.mxu0 0
  %276 = vmatpush2.bf16.msra.mxu0 %v200
  %277 = vmatprep.subr.bf16.mxu0 0
  %278 = vmatpush2.bf16.msra.mxu0 %v199
  %279 = vmatprep.mubr.bf16.mxu0 %v220
  %280 = vmatmul.mubr.bf16.gmra.mxu0 %v113
  %v281 = vpop.f32.mrf.mxu0
  %v282 = vadd.f32 %v63, %v281
  %v283 = vpop.f32.mrf.mxu0
  %v284 = vpop.f32.mrf.mxu0
  %v285 = vadd.f32 %v63, %v284
  %v286 = vpop.f32.mrf.mxu0
  %287 = vmatprep.mubr.bf16.mxu0 %v223
  %288 = vmatmul.mubr.bf16.gmra.mxu0 %v115
  %v289 = vpop.f32.mrf.mxu0
  %v290 = vadd.f32 %v63, %v289
  %v291 = vpop.f32.mrf.mxu0
  %v292 = vpop.f32.mrf.mxu0
  %v293 = vadd.f32 %v63, %v292
  %v294 = vpop.f32.mrf.mxu0
  %295 = vmatprep.mubr.bf16.mxu0 %v226
  %296 = vmatmul.mubr.bf16.gmra.mxu0 %v117
  %v297 = vpop.f32.mrf.mxu0
  %v298 = vadd.f32 %v63, %v297
  %v299 = vpop.f32.mrf.mxu0
  %v300 = vpop.f32.mrf.mxu0
  %v301 = vadd.f32 %v63, %v300
  %v302 = vpop.f32.mrf.mxu0
  %303 = vmatprep.mubr.bf16.mxu0 %v229
  %304 = vmatmul.mubr.bf16.gmra.mxu0 %v119
  %v305 = vpop.f32.mrf.mxu0
  %v306 = vadd.f32 %v63, %v305
  %v307 = vpop.f32.mrf.mxu0
  %v308 = vpop.f32.mrf.mxu0
  %v309 = vadd.f32 %v63, %v308
  %v310 = vpop.f32.mrf.mxu0
  %311 = vmatprep.mubr.bf16.mxu0 %v232
  %312 = vmatmul.mubr.bf16.gmra.mxu0 %v121
  %v313 = vpop.f32.mrf.mxu0
  %v314 = vadd.f32 %v63, %v313
  %v315 = vpop.f32.mrf.mxu0
  %v316 = vpop.f32.mrf.mxu0
  %v317 = vadd.f32 %v63, %v316
  %v318 = vpop.f32.mrf.mxu0
  %319 = vmatprep.mubr.bf16.mxu0 %v235
  %320 = vmatmul.mubr.bf16.gmra.mxu0 %v123
  %v321 = vpop.f32.mrf.mxu0
  %v322 = vadd.f32 %v63, %v321
  %v323 = vpop.f32.mrf.mxu0
  %v324 = vpop.f32.mrf.mxu0
  %v325 = vadd.f32 %v63, %v324
  %v326 = vpop.f32.mrf.mxu0
  %327 = vmatprep.mubr.bf16.mxu0 %v238
  %328 = vmatmul.mubr.bf16.gmra.mxu0 %v125
  %v329 = vpop.f32.mrf.mxu0
  %v330 = vadd.f32 %v63, %v329
  %v331 = vpop.f32.mrf.mxu0
  %v332 = vpop.f32.mrf.mxu0
  %v333 = vadd.f32 %v63, %v332
  %v334 = vpop.f32.mrf.mxu0
  %335 = vmatprep.mubr.bf16.mxu0 %v241
  %336 = vmatmul.mubr.bf16.gmra.mxu0 %v127
  %v337 = vpop.f32.mrf.mxu0
  %v338 = vadd.f32 %v63, %v337
  %v339 = vpop.f32.mrf.mxu0
  %v340 = vpop.f32.mrf.mxu0
  %v341 = vadd.f32 %v63, %v340
  %v342 = vpop.f32.mrf.mxu0
  %343 = vdwg.mxu0
  %vm344 = vcmp.ge.f32.partialorder %v282, 0.0
  %vm345 = vcmp.ge.f32.partialorder %v285, 0.0
  %vm346 = vcmp.ge.f32.partialorder %v290, 0.0
  %vm347 = vcmp.ge.f32.partialorder %v293, 0.0
  %vm348 = vcmp.ge.f32.partialorder %v298, 0.0
  %vm349 = vcmp.ge.f32.partialorder %v301, 0.0
  %vm350 = vcmp.ge.f32.partialorder %v306, 0.0
  %vm351 = vcmp.ge.f32.partialorder %v309, 0.0
  %vm352 = vcmp.ge.f32.partialorder %v314, 0.0
  %vm353 = vcmp.ge.f32.partialorder %v317, 0.0
  %vm354 = vcmp.ge.f32.partialorder %v322, 0.0
  %vm355 = vcmp.ge.f32.partialorder %v325, 0.0
  %vm356 = vcmp.ge.f32.partialorder %v330, 0.0
  %vm357 = vcmp.ge.f32.partialorder %v333, 0.0
  %vm358 = vcmp.ge.f32.partialorder %v338, 0.0
  %vm359 = vcmp.ge.f32.partialorder %v341, 0.0
  %v360 = vmul.f32 %v282, 0.1
  %v361 = vmul.f32 %v285, 0.1
  %v362 = vmul.f32 %v290, 0.1
  %v363 = vmul.f32 %v293, 0.1
  %v364 = vmul.f32 %v298, 0.1
  %v365 = vmul.f32 %v301, 0.1
  %v366 = vmul.f32 %v306, 0.1
  %v367 = vmul.f32 %v309, 0.1
  %v368 = vmul.f32 %v314, 0.1
  %v369 = vmul.f32 %v317, 0.1
  %v370 = vmul.f32 %v322, 0.1
  %v371 = vmul.f32 %v325, 0.1
  %v372 = vmul.f32 %v330, 0.1
  %v373 = vmul.f32 %v333, 0.1
  %v374 = vmul.f32 %v338, 0.1
  %v375 = vmul.f32 %v341, 0.1
  %v376 = vsel %vm344, %v282, %v360
  %v377 = vsel %vm345, %v285, %v361
  %v378 = vsel %vm346, %v290, %v362
  %v379 = vsel %vm347, %v293, %v363
  %v380 = vsel %vm348, %v298, %v364
  %v381 = vsel %vm349, %v301, %v365
  %v382 = vsel %vm350, %v306, %v366
  %v383 = vsel %vm351, %v309, %v367
  %v384 = vsel %vm352, %v314, %v368
  %v385 = vsel %vm353, %v317, %v369
  %v386 = vsel %vm354, %v322, %v370
  %v387 = vsel %vm355, %v325, %v371
  %v388 = vsel %vm356, %v330, %v372
  %v389 = vsel %vm357, %v333, %v373
  %v390 = vsel %vm358, %v338, %v374
  %v391 = vsel %vm359, %v341, %v375
  %v392 = vpack.c.bf16 %v377, %v376
  %v393 = vpack.c.bf16 %v379, %v378
  %v394 = vpack.c.bf16 %v381, %v380
  %v395 = vpack.c.bf16 %v383, %v382
  %v396 = vpack.c.bf16 %v385, %v384
  %v397 = vpack.c.bf16 %v387, %v386
  %v398 = vpack.c.bf16 %v389, %v388
  %v399 = vpack.c.bf16 %v391, %v390
  %v408 = vunpack.c.l.b16 %v392
  %v409 = vunpack.c.h.b16 %v392
  %v410 = vunpack.c.l.b16 %v393
  %v411 = vunpack.c.h.b16 %v393
  %v412 = vunpack.c.l.b16 %v394
  %v413 = vunpack.c.h.b16 %v394
  %v414 = vunpack.c.l.b16 %v395
  %v415 = vunpack.c.h.b16 %v395
  %v416 = vunpack.c.l.b16 %v396
  %v417 = vunpack.c.h.b16 %v396
  %v418 = vunpack.c.l.b16 %v397
  %v419 = vunpack.c.h.b16 %v397
  %v420 = vunpack.c.l.b16 %v398
  %v421 = vunpack.c.h.b16 %v398
  %v422 = vunpack.c.l.b16 %v399
  %v423 = vunpack.c.h.b16 %v399
  %v424 = vpack.c.b16 %v408, %v408
  %v425 = vpack.c.b16 %v409, %v409
  %v426 = vpack.c.b16 %v410, %v410
  %v427 = vpack.c.b16 %v411, %v411
  %v428 = vpack.c.b16 %v412, %v412
  %v429 = vpack.c.b16 %v413, %v413
  %v430 = vpack.c.b16 %v414, %v414
  %v431 = vpack.c.b16 %v415, %v415
  %v432 = vpack.c.b16 %v416, %v416
  %v433 = vpack.c.b16 %v417, %v417
  %v434 = vpack.c.b16 %v418, %v418
  %v435 = vpack.c.b16 %v419, %v419
  %v436 = vpack.c.b16 %v420, %v420
  %v437 = vpack.c.b16 %v421, %v421
  %v438 = vpack.c.b16 %v422, %v422
  %v439 = vpack.c.b16 %v423, %v423
  %vm456 = vcmask 60416
  %457 = vst.msk [vmem:[%s3] sm:$0xf] %vm456, %v424
  %458 = vst.msk [vmem:[%s3 + $0x4] sm:$0xf] %vm456, %v425
  %459 = vst.msk [vmem:[%s3 + $0x8] sm:$0xf] %vm456, %v426
  %460 = vst.msk [vmem:[%s3 + $0xc] sm:$0xf] %vm456, %v427
  %461 = vst.msk [vmem:[%s3 + $0x10] sm:$0xf] %vm456, %v428
  %462 = vst.msk [vmem:[%s3 + $0x14] sm:$0xf] %vm456, %v429
  %463 = vst.msk [vmem:[%s3 + $0x18] sm:$0xf] %vm456, %v430
  %464 = vst.msk [vmem:[%s3 + $0x1c] sm:$0xf] %vm456, %v431
  %465 = vst.msk [vmem:[%s3 + $0x20] sm:$0xf] %vm456, %v432
  %466 = vst.msk [vmem:[%s3 + $0x24] sm:$0xf] %vm456, %v433
  %467 = vst.msk [vmem:[%s3 + $0x28] sm:$0xf] %vm456, %v434
  %468 = vst.msk [vmem:[%s3 + $0x2c] sm:$0xf] %vm456, %v435
  %469 = vst.msk [vmem:[%s3 + $0x30] sm:$0xf] %vm456, %v436
  %470 = vst.msk [vmem:[%s3 + $0x34] sm:$0xf] %vm456, %v437
  %471 = vst.msk [vmem:[%s3 + $0x38] sm:$0xf] %vm456, %v438
  %472 = vst.msk [vmem:[%s3 + $0x3c] sm:$0xf] %vm456, %v439
  // Predicated region
  $region14: #{encoder_forward.6} parent=0 // pred_check
    _
  $region15: #{encoder_forward.6} parent=0 // pred_check_branch
    %474 = sbr.rel (0) target = $region17
  $region16: #{encoder_forward.6} parent=0 // pred_region
    _
  $region17: #{encoder_forward.6} parent=0 // pred_fallthru
    _
  // Predicated region
  $region18: #{encoder_forward.6} parent=0 // pred_check
    _
  $region19: #{encoder_forward.6} parent=0 // pred_check_branch
    %476 = sbr.rel (0) target = $region21
  $region20: #{encoder_forward.6} parent=0 // pred_region
    _
  $region21: #{encoder_forward.6} parent=0 // pred_fallthru
    _

// kernel: encoder_forward.7
$region0: #{encoder_forward.7}
  #allocation0 [shape = 'u32[]', space=smem, size = 0x4, offset = 0x4, fixed_abs, tag = 'smem constant byte address 0x4 - core index']
  #allocation1 [shape = 'u32[144,128]{1,0:T(1,128)}', space=vmem, size = 0x12000, scoped, tag = 'internal scratch']
  %s0 = inlined_call_operand.vmem [shape: bf16[16,432], index: 0, kind: input, shape index: {}]
  %s1 = inlined_call_operand.vmem [shape: bf16[432,16], index: 1, kind: input, shape index: {}]
  %s2 = inlined_call_operand.vmem [shape: f32[1,16], index: 2, kind: input, shape index: {}]
  %s3 = inlined_call_operand.vmem [shape: bf16[16,16], index: 3, kind: output, shape index: {}]
  %s4 = sld [smem:[#allocation0]]
  $region22: #{encoder_forward.7} parent=0
    _
  %s6 = ssub.s32 1, %s4
  %s7 = scalar_select 0, %s6, %s4
  // Predicated region
  $region2: #{encoder_forward.7} parent=0 // pred_check
    _
  $region3: #{encoder_forward.7} parent=0 // pred_check_branch
    %9 = sbr.rel (0) target = $region5
  $region4: #{encoder_forward.7} parent=0 // pred_region
    _
  $region5: #{encoder_forward.7} parent=0 // pred_fallthru
    _
  // Predicated region
  $region6: #{encoder_forward.7} parent=0 // pred_check
    _
  $region7: #{encoder_forward.7} parent=0 // pred_check_branch
    %11 = sbr.rel (0) target = $region9
  $region8: #{encoder_forward.7} parent=0 // pred_region
    _
  $region9: #{encoder_forward.7} parent=0 // pred_fallthru
    _
  // Predicated region
  $region10: #{encoder_forward.7} parent=0 // pred_check
    _
  $region11: #{encoder_forward.7} parent=0 // pred_check_branch
    %13 = sbr.rel (0) target = $region13
  $region12: #{encoder_forward.7} parent=0 // pred_region
    _
  $region13: #{encoder_forward.7} parent=0 // pred_fallthru
    _
  %v15 = vld [vmem:[%s0] sm:$0xff]
  %v16 = vld [vmem:[%s0 + $0x8] sm:$0xff]
  %v17 = vld [vmem:[%s0 + $0x10] sm:$0xff]
  %v18 = vld [vmem:[%s0 + $0x18] sm:$0xff]
  %v19 = vld [vmem:[%s1] sm:$0xf]
  %v20 = vld [vmem:[%s1 + $0x4] sm:$0xf]
  %v21 = vld [vmem:[%s1 + $0x8] sm:$0xf]
  %v22 = vld [vmem:[%s1 + $0xc] sm:$0xf]
  %v23 = vld [vmem:[%s1 + $0x10] sm:$0xf]
  %v24 = vld [vmem:[%s1 + $0x14] sm:$0xf]
  %v25 = vld [vmem:[%s1 + $0x18] sm:$0xf]
  %v26 = vld [vmem:[%s1 + $0x1c] sm:$0xf]
  %v27 = vld [vmem:[%s1 + $0x20] sm:$0xf]
  %v28 = vld [vmem:[%s1 + $0x24] sm:$0xf]
  %v29 = vld [vmem:[%s1 + $0x28] sm:$0xf]
  %v30 = vld [vmem:[%s1 + $0x2c] sm:$0xf]
  %v31 = vld [vmem:[%s1 + $0x30] sm:$0xf]
  %v32 = vld [vmem:[%s1 + $0x34] sm:$0xf]
  %v33 = vld [vmem:[%s1 + $0x38] sm:$0xf]
  %v34 = vld [vmem:[%s1 + $0x3c] sm:$0xf]
  %v35 = vld [vmem:[%s1 + $0x40] sm:$0xf]
  %v36 = vld [vmem:[%s1 + $0x44] sm:$0xf]
  %v37 = vld [vmem:[%s1 + $0x48] sm:$0xf]
  %v38 = vld [vmem:[%s1 + $0x4c] sm:$0xf]
  %v39 = vld [vmem:[%s1 + $0x50] sm:$0xf]
  %v40 = vld [vmem:[%s1 + $0x54] sm:$0xf]
  %v41 = vld [vmem:[%s1 + $0x58] sm:$0xf]
  %v42 = vld [vmem:[%s1 + $0x5c] sm:$0xf]
  %v43 = vld [vmem:[%s1 + $0x60] sm:$0xf]
  %v44 = vld [vmem:[%s1 + $0x64] sm:$0xf]
  %v45 = vld [vmem:[%s1 + $0x68] sm:$0xf]
  %v46 = vld [vmem:[%s1 + $0x6c] sm:$0xf]
  %v47 = vld [vmem:[%s1 + $0x70] sm:$0xf]
  %v48 = vld [vmem:[%s1 + $0x74] sm:$0xf]
  %v49 = vld [vmem:[%s1 + $0x78] sm:$0xf]
  %v50 = vld [vmem:[%s1 + $0x7c] sm:$0xf]
  %v51 = vld [vmem:[%s1 + $0x80] sm:$0xf]
  %v52 = vld [vmem:[%s1 + $0x84] sm:$0xf]
  %v53 = vld [vmem:[%s1 + $0x88] sm:$0xf]
  %v54 = vld [vmem:[%s1 + $0x8c] sm:$0xf]
  %v55 = vld [vmem:[%s1 + $0x90] sm:$0xf]
  %v56 = vld [vmem:[%s1 + $0x94] sm:$0xf]
  %v57 = vld [vmem:[%s1 + $0x98] sm:$0xf]
  %v58 = vld [vmem:[%s1 + $0x9c] sm:$0xf]
  %v59 = vld [vmem:[%s1 + $0xa0] sm:$0xf]
  %v60 = vld [vmem:[%s1 + $0xa4] sm:$0xf]
  %v61 = vld [vmem:[%s1 + $0xa8] sm:$0xf]
  %v62 = vld [vmem:[%s1 + $0xac] sm:$0xf]
  %v63 = vld [vmem:[%s1 + $0xb0] sm:$0xf]
  %v64 = vld [vmem:[%s1 + $0xb4] sm:$0xf]
  %v65 = vld [vmem:[%s1 + $0xb8] sm:$0xf]
  %v66 = vld [vmem:[%s1 + $0xbc] sm:$0xf]
  %v67 = vld [vmem:[%s1 + $0xc0] sm:$0xf]
  %v68 = vld [vmem:[%s1 + $0xc4] sm:$0xf]
  %v69 = vld [vmem:[%s1 + $0xc8] sm:$0xf]
  %v70 = vld [vmem:[%s1 + $0xcc] sm:$0xf]
  %v71 = vld [vmem:[%s1 + $0xd0] sm:$0xf]
  %v72 = vld [vmem:[%s1 + $0xd4] sm:$0xf]
  %v73 = vld [vmem:[%s2] sm:$0x1]
  %v75 = vlaneseq
  %v76 = vshrl.u32 %v75, 7
  %v77 = vsub.s32 0, %v76
  %v78 = vrot.slane %v73, %v77
  %v84 = vunpack.c.l.b16 %v15
  %v85 = vunpack.c.h.b16 %v15
  %v86 = vunpack.c.l.b16 %v16
  %v87 = vunpack.c.h.b16 %v16
  %v88 = vunpack.c.l.b16 %v17
  %v89 = vunpack.c.h.b16 %v17
  %v90 = vunpack.c.l.b16 %v18
  %v91 = vunpack.c.h.b16 %v18
  %v92 = vpack.c.b16 %v88, %v84
  %v93 = vpack.c.b16 %v89, %v85
  %v94 = vpack.c.b16 %v90, %v86
  %v95 = vpack.c.b16 %v91, %v87
  %v153 = vunpack.c.l.b16 %v19
  %v154 = vunpack.c.l.b16 %v20
  %v155 = vunpack.c.l.b16 %v21
  %v156 = vunpack.c.l.b16 %v22
  %v157 = vunpack.c.l.b16 %v23
  %v158 = vunpack.c.l.b16 %v24
  %v159 = vunpack.c.l.b16 %v25
  %v160 = vunpack.c.l.b16 %v26
  %v161 = vunpack.c.l.b16 %v27
  %v162 = vunpack.c.l.b16 %v28
  %v163 = vunpack.c.l.b16 %v29
  %v164 = vunpack.c.l.b16 %v30
  %v165 = vunpack.c.l.b16 %v31
  %v166 = vunpack.c.l.b16 %v32
  %v167 = vunpack.c.l.b16 %v33
  %v168 = vunpack.c.l.b16 %v34
  %v169 = vunpack.c.l.b16 %v35
  %v170 = vunpack.c.l.b16 %v36
  %v171 = vunpack.c.l.b16 %v37
  %v172 = vunpack.c.l.b16 %v38
  %v173 = vunpack.c.l.b16 %v39
  %v174 = vunpack.c.l.b16 %v40
  %v175 = vunpack.c.l.b16 %v41
  %v176 = vunpack.c.l.b16 %v42
  %v177 = vunpack.c.l.b16 %v43
  %v178 = vunpack.c.l.b16 %v44
  %v179 = vunpack.c.l.b16 %v45
  %v180 = vunpack.c.l.b16 %v46
  %v181 = vunpack.c.l.b16 %v47
  %v182 = vunpack.c.l.b16 %v48
  %v183 = vunpack.c.l.b16 %v49
  %v184 = vunpack.c.l.b16 %v50
  %v185 = vunpack.c.l.b16 %v51
  %v186 = vunpack.c.l.b16 %v52
  %v187 = vunpack.c.l.b16 %v53
  %v188 = vunpack.c.l.b16 %v54
  %v189 = vunpack.c.l.b16 %v55
  %v190 = vunpack.c.l.b16 %v56
  %v191 = vunpack.c.l.b16 %v57
  %v192 = vunpack.c.l.b16 %v58
  %v193 = vunpack.c.l.b16 %v59
  %v194 = vunpack.c.l.b16 %v60
  %v195 = vunpack.c.l.b16 %v61
  %v196 = vunpack.c.l.b16 %v62
  %v197 = vunpack.c.l.b16 %v63
  %v198 = vunpack.c.l.b16 %v64
  %v199 = vunpack.c.l.b16 %v65
  %v200 = vunpack.c.l.b16 %v66
  %v201 = vunpack.c.l.b16 %v67
  %v202 = vunpack.c.l.b16 %v68
  %v203 = vunpack.c.l.b16 %v69
  %v204 = vunpack.c.l.b16 %v70
  %v205 = vunpack.c.l.b16 %v71
  %v206 = vunpack.c.l.b16 %v72
  %v207 = vpack.c.b16 %v154, %v153
  %v208 = vpack.c.b16 %v156, %v155
  %v209 = vpack.c.b16 %v158, %v157
  %v210 = vpack.c.b16 %v160, %v159
  %v211 = vpack.c.b16 %v162, %v161
  %v212 = vpack.c.b16 %v164, %v163
  %v213 = vpack.c.b16 %v166, %v165
  %v214 = vpack.c.b16 %v168, %v167
  %v215 = vpack.c.b16 %v170, %v169
  %v216 = vpack.c.b16 %v172, %v171
  %v217 = vpack.c.b16 %v174, %v173
  %v218 = vpack.c.b16 %v176, %v175
  %v219 = vpack.c.b16 %v178, %v177
  %v220 = vpack.c.b16 %v180, %v179
  %v221 = vpack.c.b16 %v182, %v181
  %v222 = vpack.c.b16 %v184, %v183
  %v223 = vpack.c.b16 %v186, %v185
  %v224 = vpack.c.b16 %v188, %v187
  %v225 = vpack.c.b16 %v190, %v189
  %v226 = vpack.c.b16 %v192, %v191
  %v227 = vpack.c.b16 %v194, %v193
  %v228 = vpack.c.b16 %v196, %v195
  %v229 = vpack.c.b16 %v198, %v197
  %v230 = vpack.c.b16 %v200, %v199
  %v231 = vpack.c.b16 %v202, %v201
  %v232 = vpack.c.b16 %v204, %v203
  %v233 = vpack.c.b16 %v206, %v205
  %vm261 = vcmask 392192
  %v263 = vsel %vm261, %v95, 0
  %265 = vmatprep.subr.bf16.mxu0 0
  %266 = vmatpush1.bf16.msra.mxu0 %v214
  %267 = vmatprep.subr.bf16.mxu0 0
  %268 = vmatpush1.bf16.msra.mxu0 %v213
  %269 = vmatprep.subr.bf16.mxu0 0
  %270 = vmatpush1.bf16.msra.mxu0 %v212
  %271 = vmatprep.subr.bf16.mxu0 0
  %272 = vmatpush1.bf16.msra.mxu0 %v211
  %273 = vmatprep.subr.bf16.mxu0 0
  %274 = vmatpush1.bf16.msra.mxu0 %v210
  %275 = vmatprep.subr.bf16.mxu0 0
  %276 = vmatpush1.bf16.msra.mxu0 %v209
  %277 = vmatprep.subr.bf16.mxu0 0
  %278 = vmatpush1.bf16.msra.mxu0 %v208
  %279 = vmatprep.subr.bf16.mxu0 0
  %280 = vmatpush1.bf16.msra.mxu0 %v207
  %281 = vmatprep.subr.bf16.mxu0 0
  %282 = vmatpush2.bf16.msra.mxu0 %v222
  %283 = vmatprep.subr.bf16.mxu0 0
  %284 = vmatpush2.bf16.msra.mxu0 %v221
  %285 = vmatprep.subr.bf16.mxu0 0
  %286 = vmatpush2.bf16.msra.mxu0 %v220
  %287 = vmatprep.subr.bf16.mxu0 0
  %288 = vmatpush2.bf16.msra.mxu0 %v219
  %289 = vmatprep.subr.bf16.mxu0 0
  %290 = vmatpush2.bf16.msra.mxu0 %v218
  %291 = vmatprep.subr.bf16.mxu0 0
  %292 = vmatpush2.bf16.msra.mxu0 %v217
  %293 = vmatprep.subr.bf16.mxu0 0
  %294 = vmatpush2.bf16.msra.mxu0 %v216
  %295 = vmatprep.subr.bf16.mxu0 0
  %296 = vmatpush2.bf16.msra.mxu0 %v215
  %297 = vmatprep.mubr.bf16.mxu0 %v93
  %298 = vmatmul.mubr.bf16.gmra.mxu0 %v92
  %v299 = vpop.f32.mrf.mxu0
  %v300 = vadd.f32 %v78, %v299
  %v301 = vpop.f32.mrf.mxu0
  %v302 = vpop.f32.mrf.mxu0
  %v303 = vadd.f32 %v78, %v302
  %v304 = vpop.f32.mrf.mxu0
  %305 = vdwg.mxu0
  %306 = vmatprep.subr.bf16.mxu0 0
  %307 = vmatpush1.bf16.msra.mxu0 %v230
  %308 = vmatprep.subr.bf16.mxu0 0
  %309 = vmatpush1.bf16.msra.mxu0 %v229
  %310 = vmatprep.subr.bf16.mxu0 0
  %311 = vmatpush1.bf16.msra.mxu0 %v228
  %312 = vmatprep.subr.bf16.mxu0 0
  %313 = vmatpush1.bf16.msra.mxu0 %v227
  %314 = vmatprep.subr.bf16.mxu0 0
  %315 = vmatpush1.bf16.msra.mxu0 %v226
  %316 = vmatprep.subr.bf16.mxu0 0
  %317 = vmatpush1.bf16.msra.mxu0 %v225
  %318 = vmatprep.subr.bf16.mxu0 0
  %319 = vmatpush1.bf16.msra.mxu0 %v224
  %320 = vmatprep.subr.bf16.mxu0 0
  %321 = vmatpush1.bf16.msra.mxu0 %v223
  %322 = vmatprep.subr.bf16.mxu0 0
  %323 = vmatpush2.bf16.msra.mxu0 0
  %324 = vmatprep.subr.bf16.mxu0 0
  %325 = vmatpush2.bf16.msra.mxu0 0
  %326 = vmatprep.subr.bf16.mxu0 0
  %327 = vmatpush2.bf16.msra.mxu0 0
  %328 = vmatprep.subr.bf16.mxu0 0
  %329 = vmatpush2.bf16.msra.mxu0 0
  %330 = vmatprep.subr.bf16.mxu0 0
  %331 = vmatpush2.bf16.msra.mxu0 0
  %332 = vmatprep.subr.bf16.mxu0 0
  %333 = vmatpush2.bf16.msra.mxu0 %v233
  %334 = vmatprep.subr.bf16.mxu0 0
  %335 = vmatpush2.bf16.msra.mxu0 %v232
  %336 = vmatprep.subr.bf16.mxu0 0
  %337 = vmatpush2.bf16.msra.mxu0 %v231
  %338 = vmatprep.mubr.bf16.mxu0 %v263
  %339 = vmatmul.mubr.bf16.gmra.mxu0 %v94
  %v340 = vpop.f32.mrf.mxu0
  %v341 = vadd.f32 %v300, %v340
  %v342 = vpop.f32.mrf.mxu0
  %v343 = vpop.f32.mrf.mxu0
  %v344 = vadd.f32 %v303, %v343
  %v345 = vpop.f32.mrf.mxu0
  %346 = vdwg.mxu0
  %vm347 = vcmp.ge.f32.partialorder %v341, 0.0
  %vm348 = vcmp.ge.f32.partialorder %v344, 0.0
  %v349 = vmul.f32 %v341, 0.1
  %v350 = vmul.f32 %v344, 0.1
  %v351 = vsel %vm347, %v341, %v349
  %v352 = vsel %vm348, %v344, %v350
  %v353 = vpack.c.bf16 %v352, %v351
  %v355 = vunpack.c.l.b16 %v353
  %v356 = vunpack.c.h.b16 %v353
  %v357 = vpack.c.b16 %v355, %v355
  %v358 = vpack.c.b16 %v356, %v356
  %vm361 = vcmask 125952
  %362 = vst.msk [vmem:[%s3] sm:$0xf] %vm361, %v357
  %363 = vst.msk [vmem:[%s3 + $0x4] sm:$0xf] %vm361, %v358
  // Predicated region
  $region14: #{encoder_forward.7} parent=0 // pred_check
    _
  $region15: #{encoder_forward.7} parent=0 // pred_check_branch
    %365 = sbr.rel (0) target = $region17
  $region16: #{encoder_forward.7} parent=0 // pred_region
    _
  $region17: #{encoder_forward.7} parent=0 // pred_fallthru
    _
  // Predicated region
  $region18: #{encoder_forward.7} parent=0 // pred_check
    _
  $region19: #{encoder_forward.7} parent=0 // pred_check_branch
    %367 = sbr.rel (0) target = $region21
  $region20: #{encoder_forward.7} parent=0 // pred_region
    _
  $region21: #{encoder_forward.7} parent=0 // pred_fallthru
    _

// kernel: encoder_forward.9
$region0: #{encoder_forward.9}
  #allocation0 [shape = 'u32[]', space=smem, size = 0x4, offset = 0x4, fixed_abs, tag = 'smem constant byte address 0x4 - core index']
  #allocation1 [shape = 'u32[144,128]{1,0:T(1,128)}', space=vmem, size = 0x12000, scoped, tag = 'internal scratch']
  %s0 = inlined_call_operand.vmem [shape: bf16[16,16], index: 0, kind: input, shape index: {}]
  %s1 = inlined_call_operand.vmem [shape: bf16[16,16], index: 1, kind: input, shape index: {}]
  %s2 = inlined_call_operand.vmem [shape: f32[1,16], index: 2, kind: input, shape index: {}]
  %s3 = inlined_call_operand.vmem [shape: bf16[16,16], index: 3, kind: input, shape index: {}]
  %s4 = inlined_call_operand.vmem [shape: f32[1,16], index: 4, kind: input, shape index: {}]
  %s5 = inlined_call_operand.vmem [shape: f32[16,16], index: 5, kind: input, shape index: {}]
  %s6 = inlined_call_operand.hbm [shape: f32[16,16], index: 6, kind: output, shape index: {0}]
  %s7 = inlined_call_operand.vmem [shape: f32[1,8,128], index: 7, kind: output, shape index: {1}]
  %8 = xla_tuple %s6, %s7
  %s9 = sld [smem:[#allocation0]]
  $region42: #{encoder_forward.9} parent=0
    _
  %s11 = ssub.s32 1, %s9
  %s12 = scalar_select 0, %s11, %s9
  $region1: #{encoder_forward.9} parent=0
    #allocation2 [shape = 'u8[8192]{0}', space=vmem, size = 0x2000, scoped, tag = 'output window, operand 0, single buffered']
    #allocation3 [shape = 's32[1]{0}', space=sflag, size = 0x4, scoped, tag = 'scoped memory for encoder_forward.9']
    %13 = vsyncpa [#allocation3], 0
    // Predicated region
    $region2: #{encoder_forward.9} parent=1 // pred_check
      _
    $region3: #{encoder_forward.9} parent=1 // pred_check_branch
      %15 = sbr.rel (0) target = $region5
    $region4: #{encoder_forward.9} parent=1 // pred_region
      _
    $region5: #{encoder_forward.9} parent=1 // pred_fallthru
      _
    // Predicated region
    $region6: #{encoder_forward.9} parent=1 // pred_check
      _
    $region7: #{encoder_forward.9} parent=1 // pred_check_branch
      %17 = sbr.rel (0) target = $region9
    $region8: #{encoder_forward.9} parent=1 // pred_region
      _
    $region9: #{encoder_forward.9} parent=1 // pred_fallthru
      _
    // Predicated region
    $region10: #{encoder_forward.9} parent=1 // pred_check
      _
    $region11: #{encoder_forward.9} parent=1 // pred_check_branch
      %19 = sbr.rel (0) target = $region13
    $region12: #{encoder_forward.9} parent=1 // pred_region
      _
    $region13: #{encoder_forward.9} parent=1 // pred_fallthru
      _
    // Predicated region
    $region14: #{encoder_forward.9} parent=1 // pred_check
      _
    $region15: #{encoder_forward.9} parent=1 // pred_check_branch
      %21 = sbr.rel (0) target = $region17
    $region16: #{encoder_forward.9} parent=1 // pred_region
      _
    $region17: #{encoder_forward.9} parent=1 // pred_fallthru
      _
    // Predicated region
    $region18: #{encoder_forward.9} parent=1 // pred_check
      _
    $region19: #{encoder_forward.9} parent=1 // pred_check_branch
      %23 = sbr.rel (0) target = $region21
    $region20: #{encoder_forward.9} parent=1 // pred_region
      _
    $region21: #{encoder_forward.9} parent=1 // pred_fallthru
      _
    // Predicated region
    $region22: #{encoder_forward.9} parent=1 // pred_check
      _
    $region23: #{encoder_forward.9} parent=1 // pred_check_branch
      %25 = sbr.rel (0) target = $region25
    $region24: #{encoder_forward.9} parent=1 // pred_region
      _
    $region25: #{encoder_forward.9} parent=1 // pred_fallthru
      _
    %v27 = vld [vmem:[%s0] sm:$0xf]
    %v28 = vld [vmem:[%s0 + $0x4] sm:$0xf]
    %v29 = vld [vmem:[%s1] sm:$0xf]
    %v30 = vld [vmem:[%s1 + $0x4] sm:$0xf]
    %v31 = vld [vmem:[%s2] sm:$0x1]
    %v33 = vlaneseq
    %v34 = vshrl.u32 %v33, 7
    %v35 = vsub.s32 0, %v34
    %v36 = vrot.slane %v31, %v35
    %v40 = vunpack.c.l.b16 %v27
    %v41 = vunpack.c.l.b16 %v28
    %v42 = vpack.c.b16 %v41, %v40
    %v45 = vunpack.c.l.b16 %v29
    %v46 = vunpack.c.l.b16 %v30
    %v47 = vpack.c.b16 %v46, %v45
    %vm49 = vcmask 130048
    %v51 = vsel %vm49, %v42, 0
    %53 = vmatprep.subr.bf16.mxu0 0
    %54 = vmatpush1.bf16.msra.mxu0 0
    %55 = vmatprep.subr.bf16.mxu0 0
    %56 = vmatpush1.bf16.msra.mxu0 0
    %57 = vmatprep.subr.bf16.mxu0 0
    %58 = vmatpush1.bf16.msra.mxu0 0
    %59 = vmatprep.subr.bf16.mxu0 0
    %60 = vmatpush1.bf16.msra.mxu0 0
    %61 = vmatprep.subr.bf16.mxu0 0
    %62 = vmatpush1.bf16.msra.mxu0 0
    %63 = vmatprep.subr.bf16.mxu0 0
    %64 = vmatpush1.bf16.msra.mxu0 0
    %65 = vmatprep.subr.bf16.mxu0 0
    %66 = vmatpush1.bf16.msra.mxu0 0
    %67 = vmatprep.subr.bf16.mxu0 0
    %68 = vmatpush1.bf16.msra.mxu0 %v47
    %69 = vmatprep.subr.bf16.mxu0 0
    %70 = vmatpush2.bf16.msra.mxu0 0
    %71 = vmatprep.subr.bf16.mxu0 0
    %72 = vmatpush2.bf16.msra.mxu0 0
    %73 = vmatprep.subr.bf16.mxu0 0
    %74 = vmatpush2.bf16.msra.mxu0 0
    %75 = vmatprep.subr.bf16.mxu0 0
    %76 = vmatpush2.bf16.msra.mxu0 0
    %77 = vmatprep.subr.bf16.mxu0 0
    %78 = vmatpush2.bf16.msra.mxu0 0
    %79 = vmatprep.subr.bf16.mxu0 0
    %80 = vmatpush2.bf16.msra.mxu0 0
    %81 = vmatprep.subr.bf16.mxu0 0
    %82 = vmatpush2.bf16.msra.mxu0 0
    %83 = vmatprep.subr.bf16.mxu0 0
    %84 = vmatpush2.bf16.msra.mxu0 0
    %85 = vmatprep.mubr.bf16.mxu0 0
    %86 = vmatmul.mubr.bf16.gmra.mxu0 %v51
    %v87 = vpop.f32.mrf.mxu0
    %v88 = vadd.f32 %v36, %v87
    %v89 = vpop.f32.mrf.mxu0
    %v90 = vpop.f32.mrf.mxu0
    %v91 = vadd.f32 %v36, %v90
    %v92 = vpop.f32.mrf.mxu0
    %93 = vdwg.mxu0
    %v94 = vld [vmem:[%s3] sm:$0xf]
    %v95 = vld [vmem:[%s3 + $0x4] sm:$0xf]
    %v96 = vld [vmem:[%s4] sm:$0x1]
    %v98 = vlaneseq
    %v99 = vshrl.u32 %v98, 7
    %v100 = vsub.s32 0, %v99
    %v101 = vrot.slane %v96, %v100
    %v105 = vunpack.c.l.b16 %v94
    %v106 = vunpack.c.l.b16 %v95
    %v107 = vpack.c.b16 %v106, %v105
    %109 = vmatprep.subr.bf16.mxu0 0
    %110 = vmatpush1.bf16.msra.mxu0 0
    %111 = vmatprep.subr.bf16.mxu0 0
    %112 = vmatpush1.bf16.msra.mxu0 0
    %113 = vmatprep.subr.bf16.mxu0 0
    %114 = vmatpush1.bf16.msra.mxu0 0
    %115 = vmatprep.subr.bf16.mxu0 0
    %116 = vmatpush1.bf16.msra.mxu0 0
    %117 = vmatprep.subr.bf16.mxu0 0
    %118 = vmatpush1.bf16.msra.mxu0 0
    %119 = vmatprep.subr.bf16.mxu0 0
    %120 = vmatpush1.bf16.msra.mxu0 0
    %121 = vmatprep.subr.bf16.mxu0 0
    %122 = vmatpush1.bf16.msra.mxu0 0
    %123 = vmatprep.subr.bf16.mxu0 0
    %124 = vmatpush1.bf16.msra.mxu0 %v107
    %125 = vmatprep.subr.bf16.mxu0 0
    %126 = vmatpush2.bf16.msra.mxu0 0
    %127 = vmatprep.subr.bf16.mxu0 0
    %128 = vmatpush2.bf16.msra.mxu0 0
    %129 = vmatprep.subr.bf16.mxu0 0
    %130 = vmatpush2.bf16.msra.mxu0 0
    %131 = vmatprep.subr.bf16.mxu0 0
    %132 = vmatpush2.bf16.msra.mxu0 0
    %133 = vmatprep.subr.bf16.mxu0 0
    %134 = vmatpush2.bf16.msra.mxu0 0
    %135 = vmatprep.subr.bf16.mxu0 0
    %136 = vmatpush2.bf16.msra.mxu0 0
    %137 = vmatprep.subr.bf16.mxu0 0
    %138 = vmatpush2.bf16.msra.mxu0 0
    %139 = vmatprep.subr.bf16.mxu0 0
    %140 = vmatpush2.bf16.msra.mxu0 0
    %141 = vmatprep.mubr.bf16.mxu0 0
    %142 = vmatmul.mubr.bf16.gmra.mxu0 %v51
    %v143 = vpop.f32.mrf.mxu0
    %v144 = vadd.f32 %v101, %v143
    %v145 = vpop.f32.mrf.mxu0
    %v146 = vpop.f32.mrf.mxu0
    %v147 = vadd.f32 %v101, %v146
    %v148 = vpop.f32.mrf.mxu0
    %149 = vdwg.mxu0
    %v150 = vmin.f32 %v144, 6.0
    %v151 = vmin.f32 %v147, 6.0
    %v152 = vmul.f32 %v150, 0.5
    %v153 = vmul.f32 %v151, 0.5
    %v154 = vmul.f32 %v152, 1.442695
    %v155 = vpow.pop %v154
    %v156 = vmul.f32 %v153, 1.442695
    %v157 = vpow.pop %v156
    %v158 = vld [vmem:[%s5] sm:$0xff]
    %v159 = vld [vmem:[%s5 + $0x8] sm:$0xff]
    %v160 = vmul.f32 %v158, %v155
    %v161 = vmul.f32 %v159, %v157
    %v162 = vadd.f32 %v88, %v160
    %v163 = vadd.f32 %v91, %v161
    %164 = vst.msk [vmem:[#allocation2] sm:$0xff] %vm49, %v162
    %165 = vst.msk [vmem:[#allocation2 + $0x8] sm:$0xff] %vm49, %v163
    %v166 = vmul.f32 %v155, %v155
    %v167 = vmul.f32 %v157, %v157
    %v168 = vmul.f32 %v88, %v88
    %v169 = vmul.f32 %v91, %v91
    %v170 = vadd.f32 %v166, %v168
    %v171 = vadd.f32 %v167, %v169
    %v172 = vadd.f32 %v155, 1e-08
    %v173 = vadd.f32 %v157, 1e-08
    %v174 = vlog2.pop %v172
    %v175 = vmul.f32 %v174, 0.6931472
    %v176 = vlog2.pop %v173
    %v177 = vmul.f32 %v176, 0.6931472
    %v178 = vsub.f32 %v170, %v175
    %v179 = vsub.f32 %v171, %v177
    %v180 = vsub.f32 %v178, 0.5
    %v181 = vsub.f32 %v179, 0.5
    %v182 = vlaneseq
    %v183 = vshrl.u32 %v182, 7
    %v184 = vadd.s32 %v183, 8
    %s185 = smul.u32 0, 16
    %v186 = vstv %s185
    %v187 = vadd.s32 %v183, %v186
    %v188 = vadd.s32 %v184, %v186
    %vm189 = vcmp.lt.s32.totalorder %v187, 16
    %vm190 = vcmp.lt.s32.totalorder %v188, 16
    %v191 = vsel %vm189, %v180, 0.0
    %v192 = vsel %vm190, %v181, 0.0
    %v193 = vsel %vm49, %v191, 0.0
    %v194 = vsel %vm49, %v192, 0.0
    %v195 = vadd.f32 %v193, %v194
    %196 = vadd.xlane.f32.xlu0 %v195
    %v197 = vpop.xlane.xlu0 %196
    %v198 = vrot.slane %v197, 4
    %v199 = vadd.f32 %v197, %v198
    %v200 = vrot.slane %v199, 2
    %v201 = vadd.f32 %v199, %v200
    %v202 = vrot.slane %v201, 1
    %v203 = vadd.f32 %v201, %v202
    %s204 = vtos %v203
    %v205 = vlaneseq
    %v206 = vand.u32 %v205, 127
    %vm207 = vcmp.eq.s32.totalorder %v183, 0
    %vm208 = vcmp.eq.s32.totalorder %v206, 0
    %vm209 = vmand %vm207, %vm208
    %v210 = vstv %s204
    %v211 = vsel %vm209, %v210, 0.0
    %212 = vst [vmem:[%s7] sm:$0xff] %v211
    // Predicated region
    $region26: #{encoder_forward.9} parent=1 // pred_check
      _
    $region27: #{encoder_forward.9} parent=1 // pred_check_branch
      %214 = sbr.rel (0) target = $region29
    $region28: #{encoder_forward.9} parent=1 // pred_region
      %s216 = ssub.s32 256, 256
      %217 = vsyncadd [#allocation3], %s216
      %s218 = sshll.u32 [#allocation2], 4
      %s219 = int_to_ptr.vmem [resolvable:$true] %s218
      %224 = dma.vmem_to_hbm [thread:$0]  %s219, 256, %s6, [#allocation3], 128, 128, 8
    $region29: #{encoder_forward.9} parent=1 // pred_fallthru
      _
    // Predicated region
    $region30: #{encoder_forward.9} parent=1 // pred_check
      _
    $region31: #{encoder_forward.9} parent=1 // pred_check_branch
      %226 = sbr.rel (0) target = $region33
    $region32: #{encoder_forward.9} parent=1 // pred_region
      _
    $region33: #{encoder_forward.9} parent=1 // pred_fallthru
      _
    // Predicated region
    $region34: #{encoder_forward.9} parent=1 // pred_check
      _
    $region35: #{encoder_forward.9} parent=1 // pred_check_branch
      %228 = sbr.rel (0) target = $region37
    $region36: #{encoder_forward.9} parent=1 // pred_region
      %229 = dma.done [#allocation3], 256
    $region37: #{encoder_forward.9} parent=1 // pred_fallthru
      _
    // Predicated region
    $region38: #{encoder_forward.9} parent=1 // pred_check
      _
    $region39: #{encoder_forward.9} parent=1 // pred_check_branch
      %231 = sbr.rel (0) target = $region41
    $region40: #{encoder_forward.9} parent=1 // pred_region
      _
    $region41: #{encoder_forward.9} parent=1 // pred_fallthru
      _
    %232 = vsyncpa [#allocation3], 1

</llo_original>
